<compile_context>
chip_gen: v6e
topology: v6e:2x2x1
jax: 0.10.0
libtpu: 0.0.40
codegen_flags: <defaults>
</compile_context>

<pallas_src>
import math
import jax
import jax.numpy as jnp
from jax.experimental import pallas as pl
from jax.experimental.pallas import tpu as pltpu  # noqa: F401  (TPU backend)

# ---------------- problem sizes (small, consistent with the module) ----------
B, S_T, S_E = 2, 8, 8
D_MODEL, HEADS, D_FF = 32, 4, 64
HEAD_DIM = D_MODEL // HEADS
SCALE = 1.0 / math.sqrt(HEAD_DIM)
EPS = 1e-6

BT = B * S_T            # target rows with batch folded
BE = B * S_E            # encoder rows with batch folded
HBT = HEADS * BT        # head-replicated target rows
HBE = HEADS * BE        # head-replicated encoder rows
SEC = 128               # lane-aligned packing stride for the param/mask slabs


# ---------------- in-kernel helpers (trace into the Pallas body) -------------
def _layernorm(x, alpha, bias):
    # Matches the PyTorch module: unbiased std (divisor N-1) and (std + eps).
    mean = jnp.mean(x, axis=-1, keepdims=True)
    diff = x - mean
    var = jnp.sum(diff * diff, axis=-1, keepdims=True) * (1.0 / (D_MODEL - 1))
    inv = pl.reciprocal(jnp.sqrt(var) + EPS, approx=True)
    return alpha * diff * inv + bias


def _fused_attention(q_rep, k_sel, v_sel, bias_add, wo, bo, n_rows):
    """All-heads / all-batches attention in three MXU matmuls.

    q_rep  : (HEADS*n_rows, D) queries replicated per head (full D columns).
    k_sel  : (HEADS*n_kv,  D) keys, row-block h zeroed outside head-h columns,
             so the q.k^T contraction only sums head-h dims on diagonal blocks.
    v_sel  : (HEADS*n_kv,  D) values, masked the same way (outputs land in
             disjoint head column ranges per row-block).
    bias_add: additive mask (0 / -1e9) killing cross-batch, cross-head and
             user-masked score entries (matches masked_fill(mask==0, -1e9)).
    """
    s = jax.lax.dot_general(
        q_rep.astype(jnp.bfloat16), k_sel.astype(jnp.bfloat16),
        (((1,), (1,)), ((), ())), preferred_element_type=jnp.float32) * SCALE
    s = s + bias_add
    s = s - jnp.max(s, axis=-1, keepdims=True)
    e = jnp.exp(s)
    a = e * pl.reciprocal(jnp.sum(e, axis=-1, keepdims=True), approx=True)
    o_blk = jnp.dot(a.astype(jnp.bfloat16), v_sel.astype(jnp.bfloat16),
                    preferred_element_type=jnp.float32)        # (HEADS*n_rows, D)
    # Each row-block's output occupies a disjoint head column range, so summing
    # the blocks reassembles the (n_rows, D) concatenated-heads tensor.
    o = o_blk[0:n_rows]
    for h in range(1, HEADS):
        o = o + o_blk[h * n_rows:(h + 1) * n_rows]
    return jnp.dot(o.astype(jnp.bfloat16), wo, preferred_element_type=jnp.float32) + bo


# ---------------- the Pallas kernel (whole problem in one invocation) --------
def decoder_layer_kernel(tgt_ref, enc_ref, mask_ref, w_ref, vec_ref, out_ref):
    f32, bf16 = jnp.float32, jnp.bfloat16
    D = D_MODEL

    x_t = tgt_ref[...]                            # (BT, D) f32
    x_e = enc_ref[...]                            # (BE, D) f32

    masks = mask_ref[...]                         # (HBT, 4*SEC) f32
    qkv_colmask = masks[:, 0 * SEC:0 * SEC + 3 * D]   # 1s for Q, head-ind. for K,V
    kv_colmask  = masks[:, 1 * SEC:1 * SEC + 2 * D]   # head indicator for K,V
    self_add    = masks[:, 2 * SEC:2 * SEC + HBT]     # additive self-attn mask
    cross_add   = masks[:, 3 * SEC:3 * SEC + HBE]     # additive cross-attn mask

    w = w_ref[...]                                # (D, 7*SEC) bf16, lane-packed
    w_qkv  = w[:, 0 * SEC:0 * SEC + 3 * D]
    m_wo   = w[:, 1 * SEC:1 * SEC + D]
    c_wq   = w[:, 2 * SEC:2 * SEC + D]
    w_ckv  = w[:, 3 * SEC:3 * SEC + 2 * D]
    c_wo   = w[:, 4 * SEC:4 * SEC + D]
    ff_w1  = w[:, 5 * SEC:5 * SEC + D_FF]
    ff_w2t = w[:, 6 * SEC:6 * SEC + D_FF]         # ff_w2 transposed: (D, D_FF)

    vec = vec_ref[...]                            # (16, SEC) f32, row-packed
    b_qkv = vec[0:1, 0:3 * D]
    m_bo  = vec[1:2, 0:D]
    c_bq  = vec[2:3, 0:D]
    b_ckv = vec[3:4, 0:2 * D]
    c_bo  = vec[4:5, 0:D]
    ff_b1 = vec[5:6, 0:D_FF]
    ff_b2 = vec[6:7, 0:D]
    nm_a, nm_b = vec[7:8, 0:D], vec[8:9, 0:D]
    na_a, na_b = vec[9:10, 0:D], vec[10:11, 0:D]
    nf_a, nf_b = vec[11:12, 0:D], vec[12:13, 0:D]

    # ---- masked self-attention block (pre-norm) ----
    t_norm = _layernorm(x_t, nm_a, nm_b)                          # (BT, D)
    t_rep = jnp.concatenate([t_norm] * HEADS, axis=0)             # (HBT, D)
    qkv = jnp.dot(t_rep.astype(bf16), w_qkv, preferred_element_type=f32) + b_qkv
    qkv = qkv * qkv_colmask                                       # head-select K,V
    attn_self = _fused_attention(qkv[:, 0:D], qkv[:, D:2 * D], qkv[:, 2 * D:3 * D],
                                 self_add, m_wo, m_bo, BT)
    res1 = x_t + attn_self                                        # dropout_1 == id

    # ---- cross-attention block ----
    mnorm = _layernorm(res1, na_a, na_b)
    enorm = _layernorm(x_e, na_a, na_b)
    q_c = jnp.dot(mnorm.astype(bf16), c_wq, preferred_element_type=f32) + c_bq
    q_rep = jnp.concatenate([q_c] * HEADS, axis=0)                # (HBT, D)
    e_rep = jnp.concatenate([enorm] * HEADS, axis=0)              # (HBE, D)
    kv = (jnp.dot(e_rep.astype(bf16), w_ckv, preferred_element_type=f32)
          + b_ckv) * kv_colmask
    attn_cross = _fused_attention(q_rep, kv[:, 0:D], kv[:, D:2 * D],
                                  cross_add, c_wo, c_bo, BT)
    res2 = res1 + attn_cross                                      # dropout_2 == id

    # ---- feed-forward block ----
    fnorm = _layernorm(res2, nf_a, nf_b)
    h = jnp.maximum(
        jnp.dot(fnorm.astype(bf16), ff_w1, preferred_element_type=f32) + ff_b1, 0.0)
    ff = jax.lax.dot_general(h.astype(bf16), ff_w2t, (((1,), (1,)), ((), ())),
                             preferred_element_type=f32) + ff_b2
    out_ref[...] = res2 + ff                                      # dropout_3 == id


# ---------------- host-side packing helpers (run once per call here; would be
# ---------------- pre-packed once in a real deployment) ----------------------
def _pad_cols(a, width=SEC):
    return jnp.pad(a, ((0, 0), (0, width - a.shape[1])))


def _pack_weights(p):
    mats = [
        jnp.concatenate([p["m_wq"], p["m_wk"], p["m_wv"]], axis=1),   # (D, 3D)
        p["m_wo"],
        p["c_wq"],
        jnp.concatenate([p["c_wk"], p["c_wv"]], axis=1),              # (D, 2D)
        p["c_wo"],
        p["ff_w1"],
        p["ff_w2"].T,                                                 # (D, D_FF)
    ]
    return jnp.concatenate([_pad_cols(m) for m in mats], axis=1).astype(jnp.bfloat16)


def _pack_vectors(p):
    rows = [
        jnp.concatenate([p["m_bq"], p["m_bk"], p["m_bv"]], axis=1),
        p["m_bo"], p["c_bq"],
        jnp.concatenate([p["c_bk"], p["c_bv"]], axis=1),
        p["c_bo"], p["ff_b1"], p["ff_b2"],
        p["nm_a"], p["nm_b"], p["na_a"], p["na_b"], p["nf_a"], p["nf_b"],
    ]
    v = jnp.concatenate([_pad_cols(r) for r in rows], axis=0)         # (13, SEC)
    return jnp.pad(v, ((0, 16 - v.shape[0]), (0, 0))).astype(jnp.float32)


def _additive_mask(allow_bqk):
    """(B, Sq, Sk) bool -> (HEADS*B*Sq, HEADS*B*Sk) additive mask (0 / -1e9).

    Rows/cols are ordered (head, batch, position) to match the in-kernel
    head-replication (concatenate along sublanes)."""
    Bq, Sq, Sk = allow_bqk.shape
    eye_h = jnp.eye(HEADS, dtype=bool)
    eye_b = jnp.eye(Bq, dtype=bool)
    allow = (eye_h[:, None, None, :, None, None]
             & eye_b[None, :, None, None, :, None]
             & allow_bqk[None, :, :, None, None, :])
    allow = allow.reshape(HEADS * Bq * Sq, HEADS * Bq * Sk)
    return jnp.where(allow, 0.0, -1e9).astype(jnp.float32)


def _pack_masks(x_mask, target_mask):
    # NOTE: packing assumes HEADS*B*S_T == HEADS*B*S_E (true here) so all four
    # mask planes share the same row count.
    tmask = jnp.broadcast_to(target_mask != 0, (B, S_T, S_T))
    xmask = jnp.broadcast_to(jnp.broadcast_to(x_mask != 0, (B, 1, S_E)),
                             (B, S_T, S_E))
    self_add = _additive_mask(tmask)                                  # (HBT, HBT)
    cross_add = _additive_mask(xmask)                                 # (HBT, HBE)
    hc_t = jnp.kron(jnp.eye(HEADS, dtype=jnp.float32),
                    jnp.ones((BT, HEAD_DIM), jnp.float32))            # (HBT, D)
    hc_e = jnp.kron(jnp.eye(HEADS, dtype=jnp.float32),
                    jnp.ones((BE, HEAD_DIM), jnp.float32))            # (HBE, D)
    qkv_colmask = jnp.concatenate([jnp.ones_like(hc_t), hc_t, hc_t], axis=1)
    kv_colmask = jnp.concatenate([hc_e, hc_e], axis=1)
    return jnp.concatenate([_pad_cols(qkv_colmask), _pad_cols(kv_colmask),
                            _pad_cols(self_add), _pad_cols(cross_add)], axis=1)


# ---------------- wrapper ------------------------------------------------------
def decoder_layer(encode_x, x_mask, target_x, target_mask, params):
    w_all = _pack_weights(params)              # (D, 7*SEC) bf16   -> 1 DMA
    vec_all = _pack_vectors(params)            # (16, SEC)  f32    -> 1 DMA
    masks = _pack_masks(x_mask, target_mask)   # (HBT, 4*SEC) f32  -> 1 DMA

    tgt2 = target_x.reshape(BT, D_MODEL)       # fold batch into rows
    enc2 = encode_x.reshape(BE, D_MODEL)

    out2 = pl.pallas_call(
        decoder_layer_kernel,
        out_shape=jax.ShapeDtypeStruct((BT, D_MODEL), jnp.float32),
        # No grid / BlockSpecs: all operands (< 0.3 MB incl. params) are brought
        # whole into VMEM; a batch grid would only add serial per-step overhead.
    )(tgt2, enc2, masks, w_all, vec_all)
    return out2.reshape(B, S_T, D_MODEL)


# ---------------- pure-JAX reference (for correctness check) ------------------
def _layernorm_ref(x, alpha, bias):
    mean = jnp.mean(x, axis=-1, keepdims=True)
    diff = x - mean
    var = jnp.sum(diff * diff, axis=-1, keepdims=True) / (x.shape[-1] - 1)
    return alpha * diff / (jnp.sqrt(var) + EPS) + bias


def _mha_ref(x_q, x_k, x_v, mask, wq, bq, wk, bk, wv, bv, wo, bo):
    Bq, Sq, _ = x_q.shape
    Sk = x_k.shape[1]
    q = (x_q @ wq + bq).reshape(Bq, Sq, HEADS, HEAD_DIM)
    k = (x_k @ wk + bk).reshape(Bq, Sk, HEADS, HEAD_DIM)
    v = (x_v @ wv + bv).reshape(Bq, Sk, HEADS, HEAD_DIM)
    scores = jnp.einsum("bihd,bjhd->bhij", q, k) * SCALE
    scores = jnp.where(mask == 0, -1e9, scores)
    attn = jax.nn.softmax(scores, axis=-1)
    x = jnp.einsum("bhij,bjhd->bihd", attn, v).reshape(Bq, Sq, D_MODEL)
    return x @ wo + bo


def decoder_layer_ref(encode_x, x_mask, target_x, target_mask, p):
    t_norm = _layernorm_ref(target_x, p["nm_a"], p["nm_b"])
    masked = _mha_ref(t_norm, t_norm, t_norm, target_mask,
                      p["m_wq"], p["m_bq"], p["m_wk"], p["m_bk"],
                      p["m_wv"], p["m_bv"], p["m_wo"], p["m_bo"])
    res1 = target_x + masked
    mnorm = _layernorm_ref(res1, p["na_a"], p["na_b"])
    enorm = _layernorm_ref(encode_x, p["na_a"], p["na_b"])
    cross = _mha_ref(mnorm, enorm, enorm, x_mask,
                     p["c_wq"], p["c_bq"], p["c_wk"], p["c_bk"],
                     p["c_wv"], p["c_bv"], p["c_wo"], p["c_bo"])
    res2 = res1 + cross
    fnorm = _layernorm_ref(res2, p["nf_a"], p["nf_b"])
    ff = jnp.maximum(fnorm @ p["ff_w1"] + p["ff_b1"], 0.0) @ p["ff_w2"] + p["ff_b2"]
    return res2 + ff


# ---------------- deterministic parameter init --------------------------------
def init_params(key):
    keys = jax.random.split(key, 32)
    it = iter(keys)

    def w(shape, scale=0.1):
        return jax.random.normal(next(it), shape, jnp.float32) * scale

    p = {}
    for pre in ("m_", "c_"):
        for name in ("wq", "wk", "wv", "wo"):
            p[pre + name] = w((D_MODEL, D_MODEL))      # stored as (in, out)
        for name in ("bq", "bk", "bv", "bo"):
            p[pre + name] = w((1, D_MODEL))
    for pre in ("nm_", "na_", "nf_"):
        p[pre + "a"] = 1.0 + w((1, D_MODEL), 0.05)
        p[pre + "b"] = w((1, D_MODEL), 0.05)
    p["ff_w1"] = w((D_MODEL, D_FF))
    p["ff_b1"] = w((1, D_FF))
    p["ff_w2"] = w((D_FF, D_MODEL))
    p["ff_b2"] = w((1, D_MODEL))
    return p


if __name__ == "__main__":
    key = jax.random.PRNGKey(0)
    k1, k2, kp = jax.random.split(key, 3)
    encode_x = jax.random.normal(k1, (B, S_E, D_MODEL), jnp.float32)
    target_x = jax.random.normal(k2, (B, S_T, D_MODEL), jnp.float32)
    target_mask = jnp.tril(jnp.ones((S_T, S_T), jnp.float32))[None]      # causal (1,S_T,S_T)
    x_mask = jnp.ones((1, 1, S_E), jnp.float32).at[..., -2:].set(0.0)    # pad last 2 enc tokens
    params = init_params(kp)

    out = jax.block_until_ready(
        decoder_layer(encode_x, x_mask, target_x, target_mask, params))
    ref = decoder_layer_ref(encode_x, x_mask, target_x, target_mask, params)
    assert out.shape == (B, S_T, D_MODEL)
    max_err = float(jnp.max(jnp.abs(out - ref)))
    # bf16 MXU operands + approx reciprocal vs. an all-f32 reference.
    assert jnp.allclose(out, ref, atol=3e-2, rtol=3e-2), f"max abs err {max_err}"
    print("KERNEL_OK")
</pallas_src>

<mosaic_0001>
module attributes {stable_mosaic.version = 11 : i64} {
  func.func @decoder_layer_kernel(%arg0: memref<16x32xf32, #tpu.memory_space<vmem>>, %arg1: memref<16x32xf32, #tpu.memory_space<vmem>>, %arg2: memref<64x512xf32, #tpu.memory_space<vmem>>, %arg3: memref<32x896xbf16, #tpu.memory_space<vmem>>, %arg4: memref<16x128xf32, #tpu.memory_space<vmem>>, %arg5: memref<16x32xf32, #tpu.memory_space<vmem>>) attributes {dimension_semantics = [], scalar_prefetch = 0 : i64, scratch_operands = 0 : i64, tpu.core_type = #tpu.core_type<tc>} {
    %c0 = arith.constant 0 : index
    %c0_0 = arith.constant 0 : index
    %0 = vector.load %arg0[%c0, %c0_0] : memref<16x32xf32, #tpu.memory_space<vmem>>, vector<16x32xf32>
    %c0_1 = arith.constant 0 : index
    %c0_2 = arith.constant 0 : index
    %1 = vector.load %arg1[%c0_1, %c0_2] : memref<16x32xf32, #tpu.memory_space<vmem>>, vector<16x32xf32>
    %c0_3 = arith.constant 0 : index
    %c0_4 = arith.constant 0 : index
    %2 = vector.load %arg2[%c0_3, %c0_4] : memref<64x512xf32, #tpu.memory_space<vmem>>, vector<64x512xf32>
    %3 = vector.extract_strided_slice %2 {offsets = [0, 0], sizes = [64, 96], strides = [1, 1]} : vector<64x512xf32> to vector<64x96xf32>
    %4 = vector.extract_strided_slice %2 {offsets = [0, 128], sizes = [64, 64], strides = [1, 1]} : vector<64x512xf32> to vector<64x64xf32>
    %5 = vector.extract_strided_slice %2 {offsets = [0, 256], sizes = [64, 64], strides = [1, 1]} : vector<64x512xf32> to vector<64x64xf32>
    %6 = vector.extract_strided_slice %2 {offsets = [0, 384], sizes = [64, 64], strides = [1, 1]} : vector<64x512xf32> to vector<64x64xf32>
    %c0_5 = arith.constant 0 : index
    %c0_6 = arith.constant 0 : index
    %7 = vector.load %arg3[%c0_5, %c0_6] : memref<32x896xbf16, #tpu.memory_space<vmem>>, vector<32x896xbf16>
    %8 = vector.extract_strided_slice %7 {offsets = [0, 0], sizes = [32, 96], strides = [1, 1]} : vector<32x896xbf16> to vector<32x96xbf16>
    %9 = vector.extract_strided_slice %7 {offsets = [0, 128], sizes = [32, 32], strides = [1, 1]} : vector<32x896xbf16> to vector<32x32xbf16>
    %10 = vector.extract_strided_slice %7 {offsets = [0, 256], sizes = [32, 32], strides = [1, 1]} : vector<32x896xbf16> to vector<32x32xbf16>
    %11 = vector.extract_strided_slice %7 {offsets = [0, 384], sizes = [32, 64], strides = [1, 1]} : vector<32x896xbf16> to vector<32x64xbf16>
    %12 = vector.extract_strided_slice %7 {offsets = [0, 512], sizes = [32, 32], strides = [1, 1]} : vector<32x896xbf16> to vector<32x32xbf16>
    %13 = vector.extract_strided_slice %7 {offsets = [0, 640], sizes = [32, 64], strides = [1, 1]} : vector<32x896xbf16> to vector<32x64xbf16>
    %14 = vector.extract_strided_slice %7 {offsets = [0, 768], sizes = [32, 64], strides = [1, 1]} : vector<32x896xbf16> to vector<32x64xbf16>
    %c0_7 = arith.constant 0 : index
    %c0_8 = arith.constant 0 : index
    %15 = vector.load %arg4[%c0_7, %c0_8] : memref<16x128xf32, #tpu.memory_space<vmem>>, vector<16x128xf32>
    %16 = vector.extract_strided_slice %15 {offsets = [0, 0], sizes = [1, 96], strides = [1, 1]} : vector<16x128xf32> to vector<1x96xf32>
    %17 = vector.extract_strided_slice %15 {offsets = [1, 0], sizes = [1, 32], strides = [1, 1]} : vector<16x128xf32> to vector<1x32xf32>
    %18 = vector.extract_strided_slice %15 {offsets = [2, 0], sizes = [1, 32], strides = [1, 1]} : vector<16x128xf32> to vector<1x32xf32>
    %19 = vector.extract_strided_slice %15 {offsets = [3, 0], sizes = [1, 64], strides = [1, 1]} : vector<16x128xf32> to vector<1x64xf32>
    %20 = vector.extract_strided_slice %15 {offsets = [4, 0], sizes = [1, 32], strides = [1, 1]} : vector<16x128xf32> to vector<1x32xf32>
    %21 = vector.extract_strided_slice %15 {offsets = [5, 0], sizes = [1, 64], strides = [1, 1]} : vector<16x128xf32> to vector<1x64xf32>
    %22 = vector.extract_strided_slice %15 {offsets = [6, 0], sizes = [1, 32], strides = [1, 1]} : vector<16x128xf32> to vector<1x32xf32>
    %23 = vector.extract_strided_slice %15 {offsets = [7, 0], sizes = [1, 32], strides = [1, 1]} : vector<16x128xf32> to vector<1x32xf32>
    %24 = vector.extract_strided_slice %15 {offsets = [8, 0], sizes = [1, 32], strides = [1, 1]} : vector<16x128xf32> to vector<1x32xf32>
    %25 = vector.extract_strided_slice %15 {offsets = [9, 0], sizes = [1, 32], strides = [1, 1]} : vector<16x128xf32> to vector<1x32xf32>
    %26 = vector.extract_strided_slice %15 {offsets = [10, 0], sizes = [1, 32], strides = [1, 1]} : vector<16x128xf32> to vector<1x32xf32>
    %27 = vector.extract_strided_slice %15 {offsets = [11, 0], sizes = [1, 32], strides = [1, 1]} : vector<16x128xf32> to vector<1x32xf32>
    %28 = vector.extract_strided_slice %15 {offsets = [12, 0], sizes = [1, 32], strides = [1, 1]} : vector<16x128xf32> to vector<1x32xf32>
    %cst = arith.constant dense<0.000000e+00> : vector<16xf32>
    %29 = vector.multi_reduction <add>, %0, %cst [1] : vector<16x32xf32> to vector<16xf32>
    %30 = vector.shape_cast %29 : vector<16xf32> to vector<16x1xf32>
    %cst_9 = arith.constant 3.200000e+01 : f32
    %31 = vector.broadcast %cst_9 : f32 to vector<16x1xf32>
    %32 = arith.divf %30, %31 : vector<16x1xf32>
    %33 = vector.broadcast %32 : vector<16x1xf32> to vector<16x32xf32>
    %34 = arith.subf %0, %33 : vector<16x32xf32>
    %35 = arith.mulf %34, %34 : vector<16x32xf32>
    %cst_10 = arith.constant dense<0.000000e+00> : vector<16xf32>
    %36 = vector.multi_reduction <add>, %35, %cst_10 [1] : vector<16x32xf32> to vector<16xf32>
    %37 = vector.shape_cast %36 : vector<16xf32> to vector<16x1xf32>
    %cst_11 = arith.constant 0.0322580636 : f32
    %38 = vector.broadcast %cst_11 : f32 to vector<16x1xf32>
    %39 = arith.mulf %37, %38 : vector<16x1xf32>
    %40 = math.sqrt %39 : vector<16x1xf32>
    %cst_12 = arith.constant 9.99999997E-7 : f32
    %41 = vector.broadcast %cst_12 : f32 to vector<16x1xf32>
    %42 = arith.addf %40, %41 : vector<16x1xf32>
    %43 = tpu.reciprocal %42 {approx = true} : vector<16x1xf32> -> vector<16x1xf32>
    %44 = vector.broadcast %23 : vector<1x32xf32> to vector<16x32xf32>
    %45 = arith.mulf %44, %34 : vector<16x32xf32>
    %46 = vector.broadcast %43 : vector<16x1xf32> to vector<16x32xf32>
    %47 = arith.mulf %45, %46 : vector<16x32xf32>
    %48 = vector.broadcast %24 : vector<1x32xf32> to vector<16x32xf32>
    %49 = arith.addf %47, %48 : vector<16x32xf32>
    %50 = tpu.concatenate %49, %49, %49, %49 in 0 : vector<16x32xf32>, vector<16x32xf32>, vector<16x32xf32>, vector<16x32xf32> -> vector<64x32xf32>
    %51 = arith.truncf %50 : vector<64x32xf32> to vector<64x32xbf16>
    %cst_13 = arith.constant dense<0.000000e+00> : vector<64x96xf32>
    %52 = tpu.matmul %51, %8, %cst_13 {dimension_numbers = #tpu.dot_dimension_numbers<[1], [0], [0], [1], [0, 0, 1, 1], [], []>} : vector<64x32xbf16>, vector<32x96xbf16>, vector<64x96xf32> -> vector<64x96xf32>
    %53 = vector.broadcast %16 : vector<1x96xf32> to vector<64x96xf32>
    %54 = arith.addf %52, %53 : vector<64x96xf32>
    %55 = arith.mulf %54, %3 : vector<64x96xf32>
    %56 = vector.extract_strided_slice %55 {offsets = [0, 0], sizes = [64, 32], strides = [1, 1]} : vector<64x96xf32> to vector<64x32xf32>
    %57 = vector.extract_strided_slice %55 {offsets = [0, 32], sizes = [64, 32], strides = [1, 1]} : vector<64x96xf32> to vector<64x32xf32>
    %58 = vector.extract_strided_slice %55 {offsets = [0, 64], sizes = [64, 32], strides = [1, 1]} : vector<64x96xf32> to vector<64x32xf32>
    %59 = arith.truncf %56 : vector<64x32xf32> to vector<64x32xbf16>
    %60 = arith.truncf %57 : vector<64x32xf32> to vector<64x32xbf16>
    %cst_14 = arith.constant dense<0.000000e+00> : vector<64x64xf32>
    %61 = tpu.matmul %59, %60, %cst_14 {dimension_numbers = #tpu.dot_dimension_numbers<[1], [1], [0], [0], [0, 0, 1, 0], [], []>} : vector<64x32xbf16>, vector<64x32xbf16>, vector<64x64xf32> -> vector<64x64xf32>
    %cst_15 = arith.constant 0.353553385 : f32
    %62 = vector.broadcast %cst_15 : f32 to vector<64x64xf32>
    %63 = arith.mulf %61, %62 : vector<64x64xf32>
    %64 = arith.addf %63, %5 : vector<64x64xf32>
    %cst_16 = arith.constant dense<0xFF800000> : vector<64xf32>
    %65 = vector.multi_reduction <maximumf>, %64, %cst_16 [1] : vector<64x64xf32> to vector<64xf32>
    %66 = vector.shape_cast %65 : vector<64xf32> to vector<64x1xf32>
    %67 = vector.broadcast %66 : vector<64x1xf32> to vector<64x64xf32>
    %68 = arith.subf %64, %67 : vector<64x64xf32>
    %69 = math.exp %68 : vector<64x64xf32>
    %cst_17 = arith.constant dense<0.000000e+00> : vector<64xf32>
    %70 = vector.multi_reduction <add>, %69, %cst_17 [1] : vector<64x64xf32> to vector<64xf32>
    %71 = vector.shape_cast %70 : vector<64xf32> to vector<64x1xf32>
    %72 = tpu.reciprocal %71 {approx = true} : vector<64x1xf32> -> vector<64x1xf32>
    %73 = vector.broadcast %72 : vector<64x1xf32> to vector<64x64xf32>
    %74 = arith.mulf %69, %73 : vector<64x64xf32>
    %75 = arith.truncf %74 : vector<64x64xf32> to vector<64x64xbf16>
    %76 = arith.truncf %58 : vector<64x32xf32> to vector<64x32xbf16>
    %cst_18 = arith.constant dense<0.000000e+00> : vector<64x32xf32>
    %77 = tpu.matmul %75, %76, %cst_18 {dimension_numbers = #tpu.dot_dimension_numbers<[1], [0], [0], [1], [0, 0, 1, 1], [], []>} : vector<64x64xbf16>, vector<64x32xbf16>, vector<64x32xf32> -> vector<64x32xf32>
    %78 = vector.extract_strided_slice %77 {offsets = [0, 0], sizes = [16, 32], strides = [1, 1]} : vector<64x32xf32> to vector<16x32xf32>
    %79 = vector.extract_strided_slice %77 {offsets = [16, 0], sizes = [16, 32], strides = [1, 1]} : vector<64x32xf32> to vector<16x32xf32>
    %80 = arith.addf %78, %79 : vector<16x32xf32>
    %81 = vector.extract_strided_slice %77 {offsets = [32, 0], sizes = [16, 32], strides = [1, 1]} : vector<64x32xf32> to vector<16x32xf32>
    %82 = arith.addf %80, %81 : vector<16x32xf32>
    %83 = vector.extract_strided_slice %77 {offsets = [48, 0], sizes = [16, 32], strides = [1, 1]} : vector<64x32xf32> to vector<16x32xf32>
    %84 = arith.addf %82, %83 : vector<16x32xf32>
    %85 = arith.truncf %84 : vector<16x32xf32> to vector<16x32xbf16>
    %cst_19 = arith.constant dense<0.000000e+00> : vector<16x32xf32>
    %86 = tpu.matmul %85, %9, %cst_19 {dimension_numbers = #tpu.dot_dimension_numbers<[1], [0], [0], [1], [0, 0, 1, 1], [], []>} : vector<16x32xbf16>, vector<32x32xbf16>, vector<16x32xf32> -> vector<16x32xf32>
    %87 = vector.broadcast %17 : vector<1x32xf32> to vector<16x32xf32>
    %88 = arith.addf %86, %87 : vector<16x32xf32>
    %89 = arith.addf %0, %88 : vector<16x32xf32>
    %cst_20 = arith.constant dense<0.000000e+00> : vector<16xf32>
    %90 = vector.multi_reduction <add>, %89, %cst_20 [1] : vector<16x32xf32> to vector<16xf32>
    %91 = vector.shape_cast %90 : vector<16xf32> to vector<16x1xf32>
    %cst_21 = arith.constant 3.200000e+01 : f32
    %92 = vector.broadcast %cst_21 : f32 to vector<16x1xf32>
    %93 = arith.divf %91, %92 : vector<16x1xf32>
    %94 = vector.broadcast %93 : vector<16x1xf32> to vector<16x32xf32>
    %95 = arith.subf %89, %94 : vector<16x32xf32>
    %96 = arith.mulf %95, %95 : vector<16x32xf32>
    %cst_22 = arith.constant dense<0.000000e+00> : vector<16xf32>
    %97 = vector.multi_reduction <add>, %96, %cst_22 [1] : vector<16x32xf32> to vector<16xf32>
    %98 = vector.shape_cast %97 : vector<16xf32> to vector<16x1xf32>
    %cst_23 = arith.constant 0.0322580636 : f32
    %99 = vector.broadcast %cst_23 : f32 to vector<16x1xf32>
    %100 = arith.mulf %98, %99 : vector<16x1xf32>
    %101 = math.sqrt %100 : vector<16x1xf32>
    %cst_24 = arith.constant 9.99999997E-7 : f32
    %102 = vector.broadcast %cst_24 : f32 to vector<16x1xf32>
    %103 = arith.addf %101, %102 : vector<16x1xf32>
    %104 = tpu.reciprocal %103 {approx = true} : vector<16x1xf32> -> vector<16x1xf32>
    %105 = vector.broadcast %25 : vector<1x32xf32> to vector<16x32xf32>
    %106 = arith.mulf %105, %95 : vector<16x32xf32>
    %107 = vector.broadcast %104 : vector<16x1xf32> to vector<16x32xf32>
    %108 = arith.mulf %106, %107 : vector<16x32xf32>
    %109 = vector.broadcast %26 : vector<1x32xf32> to vector<16x32xf32>
    %110 = arith.addf %108, %109 : vector<16x32xf32>
    %cst_25 = arith.constant dense<0.000000e+00> : vector<16xf32>
    %111 = vector.multi_reduction <add>, %1, %cst_25 [1] : vector<16x32xf32> to vector<16xf32>
    %112 = vector.shape_cast %111 : vector<16xf32> to vector<16x1xf32>
    %cst_26 = arith.constant 3.200000e+01 : f32
    %113 = vector.broadcast %cst_26 : f32 to vector<16x1xf32>
    %114 = arith.divf %112, %113 : vector<16x1xf32>
    %115 = vector.broadcast %114 : vector<16x1xf32> to vector<16x32xf32>
    %116 = arith.subf %1, %115 : vector<16x32xf32>
    %117 = arith.mulf %116, %116 : vector<16x32xf32>
    %cst_27 = arith.constant dense<0.000000e+00> : vector<16xf32>
    %118 = vector.multi_reduction <add>, %117, %cst_27 [1] : vector<16x32xf32> to vector<16xf32>
    %119 = vector.shape_cast %118 : vector<16xf32> to vector<16x1xf32>
    %cst_28 = arith.constant 0.0322580636 : f32
    %120 = vector.broadcast %cst_28 : f32 to vector<16x1xf32>
    %121 = arith.mulf %119, %120 : vector<16x1xf32>
    %122 = math.sqrt %121 : vector<16x1xf32>
    %cst_29 = arith.constant 9.99999997E-7 : f32
    %123 = vector.broadcast %cst_29 : f32 to vector<16x1xf32>
    %124 = arith.addf %122, %123 : vector<16x1xf32>
    %125 = tpu.reciprocal %124 {approx = true} : vector<16x1xf32> -> vector<16x1xf32>
    %126 = vector.broadcast %25 : vector<1x32xf32> to vector<16x32xf32>
    %127 = arith.mulf %126, %116 : vector<16x32xf32>
    %128 = vector.broadcast %125 : vector<16x1xf32> to vector<16x32xf32>
    %129 = arith.mulf %127, %128 : vector<16x32xf32>
    %130 = vector.broadcast %26 : vector<1x32xf32> to vector<16x32xf32>
    %131 = arith.addf %129, %130 : vector<16x32xf32>
    %132 = arith.truncf %110 : vector<16x32xf32> to vector<16x32xbf16>
    %cst_30 = arith.constant dense<0.000000e+00> : vector<16x32xf32>
    %133 = tpu.matmul %132, %10, %cst_30 {dimension_numbers = #tpu.dot_dimension_numbers<[1], [0], [0], [1], [0, 0, 1, 1], [], []>} : vector<16x32xbf16>, vector<32x32xbf16>, vector<16x32xf32> -> vector<16x32xf32>
    %134 = vector.broadcast %18 : vector<1x32xf32> to vector<16x32xf32>
    %135 = arith.addf %133, %134 : vector<16x32xf32>
    %136 = tpu.concatenate %135, %135, %135, %135 in 0 : vector<16x32xf32>, vector<16x32xf32>, vector<16x32xf32>, vector<16x32xf32> -> vector<64x32xf32>
    %137 = tpu.concatenate %131, %131, %131, %131 in 0 : vector<16x32xf32>, vector<16x32xf32>, vector<16x32xf32>, vector<16x32xf32> -> vector<64x32xf32>
    %138 = arith.truncf %137 : vector<64x32xf32> to vector<64x32xbf16>
    %cst_31 = arith.constant dense<0.000000e+00> : vector<64x64xf32>
    %139 = tpu.matmul %138, %11, %cst_31 {dimension_numbers = #tpu.dot_dimension_numbers<[1], [0], [0], [1], [0, 0, 1, 1], [], []>} : vector<64x32xbf16>, vector<32x64xbf16>, vector<64x64xf32> -> vector<64x64xf32>
    %140 = vector.broadcast %19 : vector<1x64xf32> to vector<64x64xf32>
    %141 = arith.addf %139, %140 : vector<64x64xf32>
    %142 = arith.mulf %141, %4 : vector<64x64xf32>
    %143 = vector.extract_strided_slice %142 {offsets = [0, 0], sizes = [64, 32], strides = [1, 1]} : vector<64x64xf32> to vector<64x32xf32>
    %144 = vector.extract_strided_slice %142 {offsets = [0, 32], sizes = [64, 32], strides = [1, 1]} : vector<64x64xf32> to vector<64x32xf32>
    %145 = arith.truncf %136 : vector<64x32xf32> to vector<64x32xbf16>
    %146 = arith.truncf %143 : vector<64x32xf32> to vector<64x32xbf16>
    %cst_32 = arith.constant dense<0.000000e+00> : vector<64x64xf32>
    %147 = tpu.matmul %145, %146, %cst_32 {dimension_numbers = #tpu.dot_dimension_numbers<[1], [1], [0], [0], [0, 0, 1, 0], [], []>} : vector<64x32xbf16>, vector<64x32xbf16>, vector<64x64xf32> -> vector<64x64xf32>
    %cst_33 = arith.constant 0.353553385 : f32
    %148 = vector.broadcast %cst_33 : f32 to vector<64x64xf32>
    %149 = arith.mulf %147, %148 : vector<64x64xf32>
    %150 = arith.addf %149, %6 : vector<64x64xf32>
    %cst_34 = arith.constant dense<0xFF800000> : vector<64xf32>
    %151 = vector.multi_reduction <maximumf>, %150, %cst_34 [1] : vector<64x64xf32> to vector<64xf32>
    %152 = vector.shape_cast %151 : vector<64xf32> to vector<64x1xf32>
    %153 = vector.broadcast %152 : vector<64x1xf32> to vector<64x64xf32>
    %154 = arith.subf %150, %153 : vector<64x64xf32>
    %155 = math.exp %154 : vector<64x64xf32>
    %cst_35 = arith.constant dense<0.000000e+00> : vector<64xf32>
    %156 = vector.multi_reduction <add>, %155, %cst_35 [1] : vector<64x64xf32> to vector<64xf32>
    %157 = vector.shape_cast %156 : vector<64xf32> to vector<64x1xf32>
    %158 = tpu.reciprocal %157 {approx = true} : vector<64x1xf32> -> vector<64x1xf32>
    %159 = vector.broadcast %158 : vector<64x1xf32> to vector<64x64xf32>
    %160 = arith.mulf %155, %159 : vector<64x64xf32>
    %161 = arith.truncf %160 : vector<64x64xf32> to vector<64x64xbf16>
    %162 = arith.truncf %144 : vector<64x32xf32> to vector<64x32xbf16>
    %cst_36 = arith.constant dense<0.000000e+00> : vector<64x32xf32>
    %163 = tpu.matmul %161, %162, %cst_36 {dimension_numbers = #tpu.dot_dimension_numbers<[1], [0], [0], [1], [0, 0, 1, 1], [], []>} : vector<64x64xbf16>, vector<64x32xbf16>, vector<64x32xf32> -> vector<64x32xf32>
    %164 = vector.extract_strided_slice %163 {offsets = [0, 0], sizes = [16, 32], strides = [1, 1]} : vector<64x32xf32> to vector<16x32xf32>
    %165 = vector.extract_strided_slice %163 {offsets = [16, 0], sizes = [16, 32], strides = [1, 1]} : vector<64x32xf32> to vector<16x32xf32>
    %166 = arith.addf %164, %165 : vector<16x32xf32>
    %167 = vector.extract_strided_slice %163 {offsets = [32, 0], sizes = [16, 32], strides = [1, 1]} : vector<64x32xf32> to vector<16x32xf32>
    %168 = arith.addf %166, %167 : vector<16x32xf32>
    %169 = vector.extract_strided_slice %163 {offsets = [48, 0], sizes = [16, 32], strides = [1, 1]} : vector<64x32xf32> to vector<16x32xf32>
    %170 = arith.addf %168, %169 : vector<16x32xf32>
    %171 = arith.truncf %170 : vector<16x32xf32> to vector<16x32xbf16>
    %cst_37 = arith.constant dense<0.000000e+00> : vector<16x32xf32>
    %172 = tpu.matmul %171, %12, %cst_37 {dimension_numbers = #tpu.dot_dimension_numbers<[1], [0], [0], [1], [0, 0, 1, 1], [], []>} : vector<16x32xbf16>, vector<32x32xbf16>, vector<16x32xf32> -> vector<16x32xf32>
    %173 = vector.broadcast %20 : vector<1x32xf32> to vector<16x32xf32>
    %174 = arith.addf %172, %173 : vector<16x32xf32>
    %175 = arith.addf %89, %174 : vector<16x32xf32>
    %cst_38 = arith.constant dense<0.000000e+00> : vector<16xf32>
    %176 = vector.multi_reduction <add>, %175, %cst_38 [1] : vector<16x32xf32> to vector<16xf32>
    %177 = vector.shape_cast %176 : vector<16xf32> to vector<16x1xf32>
    %cst_39 = arith.constant 3.200000e+01 : f32
    %178 = vector.broadcast %cst_39 : f32 to vector<16x1xf32>
    %179 = arith.divf %177, %178 : vector<16x1xf32>
    %180 = vector.broadcast %179 : vector<16x1xf32> to vector<16x32xf32>
    %181 = arith.subf %175, %180 : vector<16x32xf32>
    %182 = arith.mulf %181, %181 : vector<16x32xf32>
    %cst_40 = arith.constant dense<0.000000e+00> : vector<16xf32>
    %183 = vector.multi_reduction <add>, %182, %cst_40 [1] : vector<16x32xf32> to vector<16xf32>
    %184 = vector.shape_cast %183 : vector<16xf32> to vector<16x1xf32>
    %cst_41 = arith.constant 0.0322580636 : f32
    %185 = vector.broadcast %cst_41 : f32 to vector<16x1xf32>
    %186 = arith.mulf %184, %185 : vector<16x1xf32>
    %187 = math.sqrt %186 : vector<16x1xf32>
    %cst_42 = arith.constant 9.99999997E-7 : f32
    %188 = vector.broadcast %cst_42 : f32 to vector<16x1xf32>
    %189 = arith.addf %187, %188 : vector<16x1xf32>
    %190 = tpu.reciprocal %189 {approx = true} : vector<16x1xf32> -> vector<16x1xf32>
    %191 = vector.broadcast %27 : vector<1x32xf32> to vector<16x32xf32>
    %192 = arith.mulf %191, %181 : vector<16x32xf32>
    %193 = vector.broadcast %190 : vector<16x1xf32> to vector<16x32xf32>
    %194 = arith.mulf %192, %193 : vector<16x32xf32>
    %195 = vector.broadcast %28 : vector<1x32xf32> to vector<16x32xf32>
    %196 = arith.addf %194, %195 : vector<16x32xf32>
    %197 = arith.truncf %196 : vector<16x32xf32> to vector<16x32xbf16>
    %cst_43 = arith.constant dense<0.000000e+00> : vector<16x64xf32>
    %198 = tpu.matmul %197, %13, %cst_43 {dimension_numbers = #tpu.dot_dimension_numbers<[1], [0], [0], [1], [0, 0, 1, 1], [], []>} : vector<16x32xbf16>, vector<32x64xbf16>, vector<16x64xf32> -> vector<16x64xf32>
    %199 = vector.broadcast %21 : vector<1x64xf32> to vector<16x64xf32>
    %200 = arith.addf %198, %199 : vector<16x64xf32>
    %cst_44 = arith.constant 0.000000e+00 : f32
    %201 = vector.broadcast %cst_44 : f32 to vector<16x64xf32>
    %202 = arith.maximumf %200, %201 : vector<16x64xf32>
    %203 = arith.truncf %202 : vector<16x64xf32> to vector<16x64xbf16>
    %cst_45 = arith.constant dense<0.000000e+00> : vector<16x32xf32>
    %204 = tpu.matmul %203, %14, %cst_45 {dimension_numbers = #tpu.dot_dimension_numbers<[1], [1], [0], [0], [0, 0, 1, 0], [], []>} : vector<16x64xbf16>, vector<32x64xbf16>, vector<16x32xf32> -> vector<16x32xf32>
    %205 = vector.broadcast %22 : vector<1x32xf32> to vector<16x32xf32>
    %206 = arith.addf %204, %205 : vector<16x32xf32>
    %207 = arith.addf %175, %206 : vector<16x32xf32>
    %c0_46 = arith.constant 0 : index
    %c0_47 = arith.constant 0 : index
    %208 = vector.load %arg5[%c0_46, %c0_47] : memref<16x32xf32, #tpu.memory_space<vmem>>, vector<16x32xf32>
    tpu.vector_store %arg5[%c0_46, %c0_47], %207 {strides = array<i32>} : memref<16x32xf32, #tpu.memory_space<vmem>>, vector<16x32xf32>,
    return
  }
}

</mosaic_0001>

<llo_original>
// kernel: tpu_custom_call.1
$region0: #{tpu_custom_call.1}
  #allocation0 [shape = 'u32[]', space=smem, size = 0x4, offset = 0x4, fixed_abs, tag = 'smem constant byte address 0x4 - core index']
  #allocation1 [shape = 'u32[144,128]{1,0:T(1,128)}', space=vmem, size = 0x12000, scoped, tag = 'internal scratch']
  %s0 = inlined_call_operand.hbm [shape: f32[16,32], index: 0, kind: input, shape index: {}]
  %s1 = inlined_call_operand.hbm [shape: f32[16,32], index: 1, kind: input, shape index: {}]
  %s2 = inlined_call_operand.hbm [shape: f32[64,512], index: 2, kind: input, shape index: {}]
  %s3 = inlined_call_operand.hbm [shape: bf16[32,896], index: 3, kind: input, shape index: {}]
  %s4 = inlined_call_operand.hbm [shape: f32[16,128], index: 4, kind: input, shape index: {}]
  %s5 = inlined_call_operand.hbm [shape: f32[16,32], index: 5, kind: output, shape index: {}]
  %s6 = sld [smem:[#allocation0]]
  $region50: #{tpu_custom_call.1} parent=0
    _
  %s8 = ssub.s32 1, %s6
  %s9 = scalar_select 0, %s8, %s6
  $region1: #{tpu_custom_call.1} parent=0
    #allocation2 [shape = 'u8[8192]{0}', space=vmem, size = 0x2000, scoped, tag = 'input window, operand 0, single buffered']
    #allocation3 [shape = 's32[1]{0}', space=sflag, size = 0x4, scoped, tag = 'scoped memory for tpu_custom_call.1']
    #allocation4 [shape = 's32[1]{0}', space=sflag, size = 0x4, scoped, tag = 'scoped memory for tpu_custom_call.1']
    #allocation5 [shape = 'u8[8192]{0}', space=vmem, size = 0x2000, scoped, tag = 'input window, operand 1, single buffered']
    #allocation6 [shape = 's32[1]{0}', space=sflag, size = 0x4, scoped, tag = 'scoped memory for tpu_custom_call.1']
    #allocation7 [shape = 'u8[131072]{0}', space=vmem, size = 0x20000, scoped, tag = 'input window, operand 2, single buffered']
    #allocation8 [shape = 'u8[57344]{0}', space=vmem, size = 0xe000, scoped, tag = 'input window, operand 3, single buffered']
    #allocation9 [shape = 's32[1]{0}', space=sflag, size = 0x4, scoped, tag = 'scoped memory for tpu_custom_call.1']
    #allocation10 [shape = 'u8[8192]{0}', space=vmem, size = 0x2000, scoped, tag = 'input window, operand 4, single buffered']
    #allocation11 [shape = 'u8[8192]{0}', space=vmem, size = 0x2000, scoped, tag = 'output window, operand 0, single buffered']
    %10 = vsyncpa [#allocation3], 0
    %11 = vsyncpa [#allocation6], 0
    %12 = vsyncpa [#allocation9], 0
    %13 = vsyncpa [#allocation4], 0
    // Predicated region
    $region2: #{tpu_custom_call.1} parent=1 // pred_check
      _
    $region3: #{tpu_custom_call.1} parent=1 // pred_check_branch
      %15 = sbr.rel (0) target = $region5
    $region4: #{tpu_custom_call.1} parent=1 // pred_region
      %s17 = ssub.s32 256, 256
      %18 = vsyncadd [#allocation3], %s17
      %s19 = sshll.u32 [#allocation2], 4
      %s20 = int_to_ptr.vmem [resolvable:$true] %s19
      %25 = dma.hbm_to_vmem [thread:$0]  %s0, 256, %s20, [#allocation3], 128, 128, 8
    $region5: #{tpu_custom_call.1} parent=1 // pred_fallthru
      _
    // Predicated region
    $region6: #{tpu_custom_call.1} parent=1 // pred_check
      _
    $region7: #{tpu_custom_call.1} parent=1 // pred_check_branch
      %27 = sbr.rel (0) target = $region9
    $region8: #{tpu_custom_call.1} parent=1 // pred_region
      %s29 = ssub.s32 256, 256
      %30 = vsyncadd [#allocation6], %s29
      %s31 = sshll.u32 [#allocation5], 4
      %s32 = int_to_ptr.vmem [resolvable:$true] %s31
      %37 = dma.hbm_to_vmem [thread:$0]  %s1, 256, %s32, [#allocation6], 128, 128, 8
    $region9: #{tpu_custom_call.1} parent=1 // pred_fallthru
      _
    // Predicated region
    $region10: #{tpu_custom_call.1} parent=1 // pred_check
      _
    $region11: #{tpu_custom_call.1} parent=1 // pred_check_branch
      %39 = sbr.rel (0) target = $region13
    $region12: #{tpu_custom_call.1} parent=1 // pred_region
      %s41 = ssub.s32 4096, 4096
      %42 = vsyncadd [#allocation6], %s41
      %s43 = sshll.u32 [#allocation7], 4
      %s44 = int_to_ptr.vmem [resolvable:$true] %s43
      %49 = dma.hbm_to_vmem [thread:$0]  %s2, 4096, %s44, [#allocation6], 512, 512, 32
    $region13: #{tpu_custom_call.1} parent=1 // pred_fallthru
      _
    // Predicated region
    $region14: #{tpu_custom_call.1} parent=1 // pred_check
      _
    $region15: #{tpu_custom_call.1} parent=1 // pred_check_branch
      %51 = sbr.rel (0) target = $region17
    $region16: #{tpu_custom_call.1} parent=1 // pred_region
      %s53 = ssub.s32 1792, 1792
      %54 = vsyncadd [#allocation9], %s53
      %s55 = sshll.u32 [#allocation8], 4
      %s56 = int_to_ptr.vmem [resolvable:$true] %s55
      %61 = dma.hbm_to_vmem [thread:$0]  %s3, 1792, %s56, [#allocation9], 448, 448, 28
    $region17: #{tpu_custom_call.1} parent=1 // pred_fallthru
      _
    // Predicated region
    $region18: #{tpu_custom_call.1} parent=1 // pred_check
      _
    $region19: #{tpu_custom_call.1} parent=1 // pred_check_branch
      %63 = sbr.rel (0) target = $region21
    $region20: #{tpu_custom_call.1} parent=1 // pred_region
      %s65 = ssub.s32 256, 256
      %66 = vsyncadd [#allocation9], %s65
      %s67 = sshll.u32 [#allocation10], 4
      %s68 = int_to_ptr.vmem [resolvable:$true] %s67
      %73 = dma.hbm_to_vmem [thread:$0]  %s4, 256, %s68, [#allocation9], 128, 128, 8
    $region21: #{tpu_custom_call.1} parent=1 // pred_fallthru
      _
    // Predicated region
    $region22: #{tpu_custom_call.1} parent=1 // pred_check
      _
    $region23: #{tpu_custom_call.1} parent=1 // pred_check_branch
      %75 = sbr.rel (0) target = $region25
    $region24: #{tpu_custom_call.1} parent=1 // pred_region
      %76 = dma.done [#allocation3], 256
    $region25: #{tpu_custom_call.1} parent=1 // pred_fallthru
      _
    // Predicated region
    $region26: #{tpu_custom_call.1} parent=1 // pred_check
      _
    $region27: #{tpu_custom_call.1} parent=1 // pred_check_branch
      %78 = sbr.rel (0) target = $region29
    $region28: #{tpu_custom_call.1} parent=1 // pred_region
      %79 = dma.done [#allocation6], 256
    $region29: #{tpu_custom_call.1} parent=1 // pred_fallthru
      _
    // Predicated region
    $region30: #{tpu_custom_call.1} parent=1 // pred_check
      _
    $region31: #{tpu_custom_call.1} parent=1 // pred_check_branch
      %81 = sbr.rel (0) target = $region33
    $region32: #{tpu_custom_call.1} parent=1 // pred_region
      %82 = dma.done [#allocation6], 4096
    $region33: #{tpu_custom_call.1} parent=1 // pred_fallthru
      _
    // Predicated region
    $region34: #{tpu_custom_call.1} parent=1 // pred_check
      _
    $region35: #{tpu_custom_call.1} parent=1 // pred_check_branch
      %84 = sbr.rel (0) target = $region37
    $region36: #{tpu_custom_call.1} parent=1 // pred_region
      %85 = dma.done [#allocation9], 1792
    $region37: #{tpu_custom_call.1} parent=1 // pred_fallthru
      _
    // Predicated region
    $region38: #{tpu_custom_call.1} parent=1 // pred_check
      _
    $region39: #{tpu_custom_call.1} parent=1 // pred_check_branch
      %87 = sbr.rel (0) target = $region41
    $region40: #{tpu_custom_call.1} parent=1 // pred_region
      %88 = dma.done [#allocation9], 256
    $region41: #{tpu_custom_call.1} parent=1 // pred_fallthru
      _
    %v90 = vld [vmem:[#allocation2] sm:$0xff]
    %v91 = vld [vmem:[#allocation2 + $0x8] sm:$0xff]
    %v92 = vld [vmem:[#allocation5] sm:$0xff]
    %v93 = vld [vmem:[#allocation5 + $0x8] sm:$0xff]
    %v94 = vld [vmem:[#allocation7] sm:$0xff]
    %v95 = vld [vmem:[#allocation7 + $0x8] sm:$0xff]
    %v96 = vld [vmem:[#allocation7 + $0x10] sm:$0xff]
    %v97 = vld [vmem:[#allocation7 + $0x18] sm:$0xff]
    %v98 = vld [vmem:[#allocation7 + $0x20] sm:$0xff]
    %v99 = vld [vmem:[#allocation7 + $0x28] sm:$0xff]
    %v100 = vld [vmem:[#allocation7 + $0x30] sm:$0xff]
    %v101 = vld [vmem:[#allocation7 + $0x38] sm:$0xff]
    %v102 = vld [vmem:[#allocation7 + $0x40] sm:$0xff]
    %v103 = vld [vmem:[#allocation7 + $0x48] sm:$0xff]
    %v104 = vld [vmem:[#allocation7 + $0x50] sm:$0xff]
    %v105 = vld [vmem:[#allocation7 + $0x58] sm:$0xff]
    %v106 = vld [vmem:[#allocation7 + $0x60] sm:$0xff]
    %v107 = vld [vmem:[#allocation7 + $0x68] sm:$0xff]
    %v108 = vld [vmem:[#allocation7 + $0x70] sm:$0xff]
    %v109 = vld [vmem:[#allocation7 + $0x78] sm:$0xff]
    %v110 = vld [vmem:[#allocation7 + $0x80] sm:$0xff]
    %v111 = vld [vmem:[#allocation7 + $0x88] sm:$0xff]
    %v112 = vld [vmem:[#allocation7 + $0x90] sm:$0xff]
    %v113 = vld [vmem:[#allocation7 + $0x98] sm:$0xff]
    %v114 = vld [vmem:[#allocation7 + $0xa0] sm:$0xff]
    %v115 = vld [vmem:[#allocation7 + $0xa8] sm:$0xff]
    %v116 = vld [vmem:[#allocation7 + $0xb0] sm:$0xff]
    %v117 = vld [vmem:[#allocation7 + $0xb8] sm:$0xff]
    %v118 = vld [vmem:[#allocation7 + $0xc0] sm:$0xff]
    %v119 = vld [vmem:[#allocation7 + $0xc8] sm:$0xff]
    %v120 = vld [vmem:[#allocation7 + $0xd0] sm:$0xff]
    %v121 = vld [vmem:[#allocation7 + $0xd8] sm:$0xff]
    %v122 = vld [vmem:[#allocation7 + $0xe0] sm:$0xff]
    %v123 = vld [vmem:[#allocation7 + $0xe8] sm:$0xff]
    %v124 = vld [vmem:[#allocation7 + $0xf0] sm:$0xff]
    %v125 = vld [vmem:[#allocation7 + $0xf8] sm:$0xff]
    %v126 = vld [vmem:[#allocation8] sm:$0xff]
    %v127 = vld [vmem:[#allocation8 + $0x8] sm:$0xff]
    %v128 = vld [vmem:[#allocation8 + $0x10] sm:$0xff]
    %v129 = vld [vmem:[#allocation8 + $0x18] sm:$0xf]
    %v130 = vld [vmem:[#allocation8 + $0x1c] sm:$0xff]
    %v131 = vld [vmem:[#allocation8 + $0x24] sm:$0xff]
    %v132 = vld [vmem:[#allocation8 + $0x2c] sm:$0xff]
    %v133 = vld [vmem:[#allocation8 + $0x34] sm:$0xf]
    %v134 = vld [vmem:[#allocation8 + $0x38] sm:$0xff]
    %v135 = vld [vmem:[#allocation8 + $0x40] sm:$0xff]
    %v136 = vld [vmem:[#allocation8 + $0x48] sm:$0xff]
    %v137 = vld [vmem:[#allocation8 + $0x50] sm:$0xf]
    %v138 = vld [vmem:[#allocation8 + $0x54] sm:$0xff]
    %v139 = vld [vmem:[#allocation8 + $0x5c] sm:$0xff]
    %v140 = vld [vmem:[#allocation8 + $0x64] sm:$0xff]
    %v141 = vld [vmem:[#allocation8 + $0x6c] sm:$0xf]
    %v142 = vld [vmem:[#allocation10] sm:$0xff]
    %v143 = vld [vmem:[#allocation10 + $0x8] sm:$0xff]
    %vm144 = vcmask 261120
    %v145 = vsel %vm144, %v90, 0.0
    %146 = vadd.xlane.f32.xlu0 %v145
    %v147 = vpop.xlane.xlu0 %146
    %v148 = vsel %vm144, %v91, 0.0
    %149 = vadd.xlane.f32.xlu0 %v148
    %v150 = vpop.xlane.xlu0 %149
    %v151 = vrcp.pop 32.0
    %v152 = vmul.f32 %v147, %v151
    %v153 = vmul.f32 %v150, %v151
    %v154 = vsub.f32 %v90, %v152
    %v155 = vsub.f32 %v91, %v153
    %v156 = vmul.f32 %v154, %v154
    %v157 = vmul.f32 %v155, %v155
    %v158 = vsel %vm144, %v156, 0.0
    %159 = vadd.xlane.f32.xlu0 %v158
    %v160 = vpop.xlane.xlu0 %159
    %v161 = vsel %vm144, %v157, 0.0
    %162 = vadd.xlane.f32.xlu0 %v161
    %v163 = vpop.xlane.xlu0 %162
    %v164 = vmul.f32 %v160, 0.032258064
    %v165 = vmul.f32 %v163, 0.032258064
    %v166 = vrsqrt.pop %v164
    %v167 = vmul.f32 %v164, %v166
    %vm168 = vcmp.eq.f32.partialorder %v164, inf
    %v169 = vsel %vm168, %v164, %v167
    %vm170 = vcmp.eq.f32.partialorder %v164, 0.0
    %v171 = vand.u32 %v164, 2147483648
    %v172 = vsel %vm170, %v171, %v169
    %v173 = vrsqrt.pop %v165
    %v174 = vmul.f32 %v165, %v173
    %vm175 = vcmp.eq.f32.partialorder %v165, inf
    %v176 = vsel %vm175, %v165, %v174
    %vm177 = vcmp.eq.f32.partialorder %v165, 0.0
    %v178 = vand.u32 %v165, 2147483648
    %v179 = vsel %vm177, %v178, %v176
    %v180 = vadd.f32 %v172, 1e-06
    %v181 = vadd.f32 %v179, 1e-06
    %v182 = vrcp.pop %v180
    %v183 = vrcp.pop %v181
    %v184 = vlaneseq
    %v185 = vshrl.u32 %v184, 7
    %v186 = vsub.s32 7, %v185
    %v187 = vrot.slane %v142, %v186
    %v188 = vmul.f32 %v187, %v154
    %v189 = vmul.f32 %v187, %v155
    %v190 = vmul.f32 %v188, %v182
    %v191 = vmul.f32 %v189, %v183
    %v192 = vlaneseq
    %v193 = vshrl.u32 %v192, 7
    %v194 = vsub.s32 0, %v193
    %v195 = vrot.slane %v143, %v194
    %v196 = vadd.f32 %v190, %v195
    %v197 = vadd.f32 %v191, %v195
    %v198 = vpack.c.bf16 %v197, %v196
    %v199 = vlaneseq
    %v200 = vshrl.u32 %v199, 7
    %v201 = vsub.s32 0, %v200
    %v202 = vrot.slane %v142, %v201
    %v207 = vunpack.c.l.b16 %v126
    %v208 = vunpack.c.l.b16 %v130
    %v209 = vunpack.c.l.b16 %v134
    %v210 = vunpack.c.l.b16 %v138
    %v211 = vpack.c.b16 %v208, %v207
    %v212 = vpack.c.b16 %v210, %v209
    %v216 = vsel %vm144, %v198, 0
    %218 = vmatprep.subr.bf16.mxu0 0
    %219 = vmatpush1.bf16.msra.mxu0 0
    %220 = vmatprep.subr.bf16.mxu0 0
    %221 = vmatpush1.bf16.msra.mxu0 0
    %222 = vmatprep.subr.bf16.mxu0 0
    %223 = vmatpush1.bf16.msra.mxu0 0
    %224 = vmatprep.subr.bf16.mxu0 0
    %225 = vmatpush1.bf16.msra.mxu0 0
    %226 = vmatprep.subr.bf16.mxu0 0
    %227 = vmatpush1.bf16.msra.mxu0 0
    %228 = vmatprep.subr.bf16.mxu0 0
    %229 = vmatpush1.bf16.msra.mxu0 0
    %230 = vmatprep.subr.bf16.mxu0 0
    %231 = vmatpush1.bf16.msra.mxu0 %v212
    %232 = vmatprep.subr.bf16.mxu0 0
    %233 = vmatpush1.bf16.msra.mxu0 %v211
    %234 = vmatprep.subr.bf16.mxu0 0
    %235 = vmatpush2.bf16.msra.mxu0 0
    %236 = vmatprep.subr.bf16.mxu0 0
    %237 = vmatpush2.bf16.msra.mxu0 0
    %238 = vmatprep.subr.bf16.mxu0 0
    %239 = vmatpush2.bf16.msra.mxu0 0
    %240 = vmatprep.subr.bf16.mxu0 0
    %241 = vmatpush2.bf16.msra.mxu0 0
    %242 = vmatprep.subr.bf16.mxu0 0
    %243 = vmatpush2.bf16.msra.mxu0 0
    %244 = vmatprep.subr.bf16.mxu0 0
    %245 = vmatpush2.bf16.msra.mxu0 0
    %246 = vmatprep.subr.bf16.mxu0 0
    %247 = vmatpush2.bf16.msra.mxu0 0
    %248 = vmatprep.subr.bf16.mxu0 0
    %249 = vmatpush2.bf16.msra.mxu0 0
    %250 = vmatprep.mubr.bf16.mxu0 0
    %251 = vmatmul.mubr.bf16.gmra.mxu0 %v216
    %v252 = vpop.f32.mrf.mxu0
    %v253 = vadd.f32 %v202, %v252
    %v254 = vpop.f32.mrf.mxu0
    %v255 = vpop.f32.mrf.mxu0
    %v256 = vadd.f32 %v202, %v255
    %v257 = vpop.f32.mrf.mxu0
    %258 = vmatprep.mubr.bf16.mxu0 0
    %259 = vmatmul.mubr.bf16.gmra.mxu0 %v216
    %v260 = vpop.f32.mrf.mxu0
    %v261 = vadd.f32 %v202, %v260
    %v262 = vpop.f32.mrf.mxu0
    %v263 = vpop.f32.mrf.mxu0
    %v264 = vadd.f32 %v202, %v263
    %v265 = vpop.f32.mrf.mxu0
    %266 = vmatprep.mubr.bf16.mxu0 0
    %267 = vmatmul.mubr.bf16.gmra.mxu0 %v216
    %v268 = vpop.f32.mrf.mxu0
    %v269 = vadd.f32 %v202, %v268
    %v270 = vpop.f32.mrf.mxu0
    %v271 = vpop.f32.mrf.mxu0
    %v272 = vadd.f32 %v202, %v271
    %v273 = vpop.f32.mrf.mxu0
    %274 = vmatprep.mubr.bf16.mxu0 0
    %275 = vmatmul.mubr.bf16.gmra.mxu0 %v216
    %v276 = vpop.f32.mrf.mxu0
    %v277 = vadd.f32 %v202, %v276
    %v278 = vpop.f32.mrf.mxu0
    %v279 = vpop.f32.mrf.mxu0
    %v280 = vadd.f32 %v202, %v279
    %v281 = vpop.f32.mrf.mxu0
    %282 = vdwg.mxu0
    %v283 = vmul.f32 %v253, %v94
    %v284 = vmul.f32 %v256, %v98
    %v285 = vmul.f32 %v261, %v102
    %v286 = vmul.f32 %v264, %v106
    %v287 = vmul.f32 %v269, %v110
    %v288 = vmul.f32 %v272, %v114
    %v289 = vmul.f32 %v277, %v118
    %v290 = vmul.f32 %v280, %v122
    %v291 = vpack.c.bf16 %v284, %v283
    %v292 = vpack.c.bf16 %v286, %v285
    %v293 = vpack.c.bf16 %v288, %v287
    %v294 = vpack.c.bf16 %v290, %v289
    %299 = vrot.lane.b32.xlu0 %v291, 96
    %v300 = vpop.permute.xlu0 %299
    %301 = vrot.lane.b32.xlu0 %v292, 96
    %v302 = vpop.permute.xlu0 %301
    %303 = vrot.lane.b32.xlu0 %v293, 96
    %v304 = vpop.permute.xlu0 %303
    %305 = vrot.lane.b32.xlu0 %v294, 96
    %v306 = vpop.permute.xlu0 %305
    %v308 = vsel %vm144, %v291, 0
    %v311 = vsel %vm144, %v292, 0
    %v314 = vsel %vm144, %v293, 0
    %v317 = vsel %vm144, %v294, 0
    %v320 = vsel %vm144, %v300, 0
    %v323 = vsel %vm144, %v302, 0
    %v326 = vsel %vm144, %v304, 0
    %v329 = vsel %vm144, %v306, 0
    %331 = vmatprep.subr.bf16.mxu0 0
    %332 = vmatpush1.bf16.xpose.msra.mxu0 0
    %333 = vmatprep.subr.bf16.mxu0 0
    %334 = vmatpush1.bf16.xpose.msra.mxu0 0
    %335 = vmatprep.subr.bf16.mxu0 0
    %336 = vmatpush1.bf16.xpose.msra.mxu0 0
    %337 = vmatprep.subr.bf16.mxu0 0
    %338 = vmatpush1.bf16.xpose.msra.mxu0 0
    %339 = vmatprep.subr.bf16.mxu0 0
    %340 = vmatpush1.bf16.xpose.msra.mxu0 %v329
    %341 = vmatprep.subr.bf16.mxu0 0
    %342 = vmatpush1.bf16.xpose.msra.mxu0 %v326
    %343 = vmatprep.subr.bf16.mxu0 0
    %344 = vmatpush1.bf16.xpose.msra.mxu0 %v323
    %345 = vmatprep.subr.bf16.mxu0 0
    %346 = vmatpush1.bf16.xpose.msra.mxu0 %v320
    %347 = vmatprep.subr.bf16.mxu0 0
    %348 = vmatpush2.bf16.xpose.msra.mxu0 0
    %349 = vmatprep.subr.bf16.mxu0 0
    %350 = vmatpush2.bf16.xpose.msra.mxu0 0
    %351 = vmatprep.subr.bf16.mxu0 0
    %352 = vmatpush2.bf16.xpose.msra.mxu0 0
    %353 = vmatprep.subr.bf16.mxu0 0
    %354 = vmatpush2.bf16.xpose.msra.mxu0 0
    %355 = vmatprep.subr.bf16.mxu0 0
    %356 = vmatpush2.bf16.xpose.msra.mxu0 0
    %357 = vmatprep.subr.bf16.mxu0 0
    %358 = vmatpush2.bf16.xpose.msra.mxu0 0
    %359 = vmatprep.subr.bf16.mxu0 0
    %360 = vmatpush2.bf16.xpose.msra.mxu0 0
    %361 = vmatprep.subr.bf16.mxu0 0
    %362 = vmatpush2.bf16.xpose.msra.mxu0 0
    %363 = vmatprep.mubr.bf16.mxu0 0
    %364 = vmatmul.mubr.bf16.gmra.mxu0 %v308
    %v365 = vpop.f32.mrf.mxu0
    %v366 = vadd.f32 0.0, %v365
    %v367 = vpop.f32.mrf.mxu0
    %v368 = vpop.f32.mrf.mxu0
    %v369 = vadd.f32 0.0, %v368
    %v370 = vpop.f32.mrf.mxu0
    %371 = vmatprep.mubr.bf16.mxu0 0
    %372 = vmatmul.mubr.bf16.gmra.mxu0 %v311
    %v373 = vpop.f32.mrf.mxu0
    %v374 = vadd.f32 0.0, %v373
    %v375 = vpop.f32.mrf.mxu0
    %v376 = vpop.f32.mrf.mxu0
    %v377 = vadd.f32 0.0, %v376
    %v378 = vpop.f32.mrf.mxu0
    %379 = vmatprep.mubr.bf16.mxu0 0
    %380 = vmatmul.mubr.bf16.gmra.mxu0 %v314
    %v381 = vpop.f32.mrf.mxu0
    %v382 = vadd.f32 0.0, %v381
    %v383 = vpop.f32.mrf.mxu0
    %v384 = vpop.f32.mrf.mxu0
    %v385 = vadd.f32 0.0, %v384
    %v386 = vpop.f32.mrf.mxu0
    %387 = vmatprep.mubr.bf16.mxu0 0
    %388 = vmatmul.mubr.bf16.gmra.mxu0 %v317
    %v389 = vpop.f32.mrf.mxu0
    %v390 = vadd.f32 0.0, %v389
    %v391 = vpop.f32.mrf.mxu0
    %v392 = vpop.f32.mrf.mxu0
    %v393 = vadd.f32 0.0, %v392
    %v394 = vpop.f32.mrf.mxu0
    %395 = vdwg.mxu0
    %v396 = vmul.f32 %v366, 0.35355338
    %v397 = vmul.f32 %v369, 0.35355338
    %v398 = vmul.f32 %v374, 0.35355338
    %v399 = vmul.f32 %v377, 0.35355338
    %v400 = vmul.f32 %v382, 0.35355338
    %v401 = vmul.f32 %v385, 0.35355338
    %v402 = vmul.f32 %v390, 0.35355338
    %v403 = vmul.f32 %v393, 0.35355338
    %v404 = vadd.f32 %v396, %v96
    %v405 = vadd.f32 %v397, %v100
    %v406 = vadd.f32 %v398, %v104
    %v407 = vadd.f32 %v399, %v108
    %v408 = vadd.f32 %v400, %v112
    %v409 = vadd.f32 %v401, %v116
    %v410 = vadd.f32 %v402, %v120
    %v411 = vadd.f32 %v403, %v124
    %vm412 = vcmask 523264
    %v413 = vsel %vm412, %v404, -inf
    %414 = vmax.xlane.f32.xlu0 %v413
    %v415 = vpop.xlane.xlu0 %414
    %v416 = vsel %vm412, %v405, -inf
    %417 = vmax.xlane.f32.xlu0 %v416
    %v418 = vpop.xlane.xlu0 %417
    %v419 = vsel %vm412, %v406, -inf
    %420 = vmax.xlane.f32.xlu0 %v419
    %v421 = vpop.xlane.xlu0 %420
    %v422 = vsel %vm412, %v407, -inf
    %423 = vmax.xlane.f32.xlu0 %v422
    %v424 = vpop.xlane.xlu0 %423
    %v425 = vsel %vm412, %v408, -inf
    %426 = vmax.xlane.f32.xlu0 %v425
    %v427 = vpop.xlane.xlu0 %426
    %v428 = vsel %vm412, %v409, -inf
    %429 = vmax.xlane.f32.xlu0 %v428
    %v430 = vpop.xlane.xlu0 %429
    %v431 = vsel %vm412, %v410, -inf
    %432 = vmax.xlane.f32.xlu0 %v431
    %v433 = vpop.xlane.xlu0 %432
    %v434 = vsel %vm412, %v411, -inf
    %435 = vmax.xlane.f32.xlu0 %v434
    %v436 = vpop.xlane.xlu0 %435
    %v437 = vsub.f32 %v404, %v415
    %v438 = vsub.f32 %v405, %v418
    %v439 = vsub.f32 %v406, %v421
    %v440 = vsub.f32 %v407, %v424
    %v441 = vsub.f32 %v408, %v427
    %v442 = vsub.f32 %v409, %v430
    %v443 = vsub.f32 %v410, %v433
    %v444 = vsub.f32 %v411, %v436
    %v445 = vmul.f32 %v437, 1.442695
    %v446 = vpow.pop %v445
    %v447 = vmul.f32 %v438, 1.442695
    %v448 = vpow.pop %v447
    %v449 = vmul.f32 %v439, 1.442695
    %v450 = vpow.pop %v449
    %v451 = vmul.f32 %v440, 1.442695
    %v452 = vpow.pop %v451
    %v453 = vmul.f32 %v441, 1.442695
    %v454 = vpow.pop %v453
    %v455 = vmul.f32 %v442, 1.442695
    %v456 = vpow.pop %v455
    %v457 = vmul.f32 %v443, 1.442695
    %v458 = vpow.pop %v457
    %v459 = vmul.f32 %v444, 1.442695
    %v460 = vpow.pop %v459
    %v461 = vsel %vm412, %v446, 0.0
    %462 = vadd.xlane.f32.xlu0 %v461
    %v463 = vpop.xlane.xlu0 %462
    %v464 = vsel %vm412, %v448, 0.0
    %465 = vadd.xlane.f32.xlu0 %v464
    %v466 = vpop.xlane.xlu0 %465
    %v467 = vsel %vm412, %v450, 0.0
    %468 = vadd.xlane.f32.xlu0 %v467
    %v469 = vpop.xlane.xlu0 %468
    %v470 = vsel %vm412, %v452, 0.0
    %471 = vadd.xlane.f32.xlu0 %v470
    %v472 = vpop.xlane.xlu0 %471
    %v473 = vsel %vm412, %v454, 0.0
    %474 = vadd.xlane.f32.xlu0 %v473
    %v475 = vpop.xlane.xlu0 %474
    %v476 = vsel %vm412, %v456, 0.0
    %477 = vadd.xlane.f32.xlu0 %v476
    %v478 = vpop.xlane.xlu0 %477
    %v479 = vsel %vm412, %v458, 0.0
    %480 = vadd.xlane.f32.xlu0 %v479
    %v481 = vpop.xlane.xlu0 %480
    %v482 = vsel %vm412, %v460, 0.0
    %483 = vadd.xlane.f32.xlu0 %v482
    %v484 = vpop.xlane.xlu0 %483
    %v485 = vrcp.pop %v463
    %v486 = vrcp.pop %v466
    %v487 = vrcp.pop %v469
    %v488 = vrcp.pop %v472
    %v489 = vrcp.pop %v475
    %v490 = vrcp.pop %v478
    %v491 = vrcp.pop %v481
    %v492 = vrcp.pop %v484
    %v493 = vmul.f32 %v446, %v485
    %v494 = vmul.f32 %v448, %v486
    %v495 = vmul.f32 %v450, %v487
    %v496 = vmul.f32 %v452, %v488
    %v497 = vmul.f32 %v454, %v489
    %v498 = vmul.f32 %v456, %v490
    %v499 = vmul.f32 %v458, %v491
    %v500 = vmul.f32 %v460, %v492
    %v501 = vpack.c.bf16 %v494, %v493
    %v502 = vpack.c.bf16 %v496, %v495
    %v503 = vpack.c.bf16 %v498, %v497
    %v504 = vpack.c.bf16 %v500, %v499
    %505 = vrot.lane.b32.xlu0 %v291, 64
    %v506 = vpop.permute.xlu0 %505
    %507 = vrot.lane.b32.xlu0 %v292, 64
    %v508 = vpop.permute.xlu0 %507
    %509 = vrot.lane.b32.xlu0 %v293, 64
    %v510 = vpop.permute.xlu0 %509
    %511 = vrot.lane.b32.xlu0 %v294, 64
    %v512 = vpop.permute.xlu0 %511
    %v518 = vsel %vm412, %v501, 0
    %v521 = vsel %vm412, %v502, 0
    %v524 = vsel %vm412, %v503, 0
    %v527 = vsel %vm412, %v504, 0
    %529 = vmatprep.subr.bf16.mxu0 0
    %530 = vmatpush1.bf16.msra.mxu0 0
    %531 = vmatprep.subr.bf16.mxu0 0
    %532 = vmatpush1.bf16.msra.mxu0 0
    %533 = vmatprep.subr.bf16.mxu0 0
    %534 = vmatpush1.bf16.msra.mxu0 0
    %535 = vmatprep.subr.bf16.mxu0 0
    %536 = vmatpush1.bf16.msra.mxu0 0
    %537 = vmatprep.subr.bf16.mxu0 0
    %538 = vmatpush1.bf16.msra.mxu0 %v512
    %539 = vmatprep.subr.bf16.mxu0 0
    %540 = vmatpush1.bf16.msra.mxu0 %v510
    %541 = vmatprep.subr.bf16.mxu0 0
    %542 = vmatpush1.bf16.msra.mxu0 %v508
    %543 = vmatprep.subr.bf16.mxu0 0
    %544 = vmatpush1.bf16.msra.mxu0 %v506
    %545 = vmatprep.subr.bf16.mxu0 0
    %546 = vmatpush2.bf16.msra.mxu0 0
    %547 = vmatprep.subr.bf16.mxu0 0
    %548 = vmatpush2.bf16.msra.mxu0 0
    %549 = vmatprep.subr.bf16.mxu0 0
    %550 = vmatpush2.bf16.msra.mxu0 0
    %551 = vmatprep.subr.bf16.mxu0 0
    %552 = vmatpush2.bf16.msra.mxu0 0
    %553 = vmatprep.subr.bf16.mxu0 0
    %554 = vmatpush2.bf16.msra.mxu0 0
    %555 = vmatprep.subr.bf16.mxu0 0
    %556 = vmatpush2.bf16.msra.mxu0 0
    %557 = vmatprep.subr.bf16.mxu0 0
    %558 = vmatpush2.bf16.msra.mxu0 0
    %559 = vmatprep.subr.bf16.mxu0 0
    %560 = vmatpush2.bf16.msra.mxu0 0
    %561 = vmatprep.mubr.bf16.mxu0 0
    %562 = vmatmul.mubr.bf16.gmra.mxu0 %v518
    %v563 = vpop.f32.mrf.mxu0
    %v564 = vadd.f32 0.0, %v563
    %v565 = vpop.f32.mrf.mxu0
    %v566 = vpop.f32.mrf.mxu0
    %v567 = vadd.f32 0.0, %v566
    %v568 = vpop.f32.mrf.mxu0
    %569 = vmatprep.mubr.bf16.mxu0 0
    %570 = vmatmul.mubr.bf16.gmra.mxu0 %v521
    %v571 = vpop.f32.mrf.mxu0
    %v572 = vadd.f32 0.0, %v571
    %v573 = vpop.f32.mrf.mxu0
    %v574 = vpop.f32.mrf.mxu0
    %v575 = vadd.f32 0.0, %v574
    %v576 = vpop.f32.mrf.mxu0
    %577 = vmatprep.mubr.bf16.mxu0 0
    %578 = vmatmul.mubr.bf16.gmra.mxu0 %v524
    %v579 = vpop.f32.mrf.mxu0
    %v580 = vadd.f32 0.0, %v579
    %v581 = vpop.f32.mrf.mxu0
    %v582 = vpop.f32.mrf.mxu0
    %v583 = vadd.f32 0.0, %v582
    %v584 = vpop.f32.mrf.mxu0
    %585 = vmatprep.mubr.bf16.mxu0 0
    %586 = vmatmul.mubr.bf16.gmra.mxu0 %v527
    %v587 = vpop.f32.mrf.mxu0
    %v588 = vadd.f32 0.0, %v587
    %v589 = vpop.f32.mrf.mxu0
    %v590 = vpop.f32.mrf.mxu0
    %v591 = vadd.f32 0.0, %v590
    %v592 = vpop.f32.mrf.mxu0
    %593 = vdwg.mxu0
    %v594 = vadd.f32 %v564, %v572
    %v595 = vadd.f32 %v567, %v575
    %v596 = vadd.f32 %v594, %v580
    %v597 = vadd.f32 %v595, %v583
    %v598 = vadd.f32 %v596, %v588
    %v599 = vadd.f32 %v597, %v591
    %v600 = vpack.c.bf16 %v599, %v598
    %v601 = vlaneseq
    %v602 = vshrl.u32 %v601, 7
    %v603 = vsub.s32 1, %v602
    %v604 = vrot.slane %v142, %v603
    %v605 = vunpack.c.h.b16 %v126
    %v606 = vunpack.c.h.b16 %v130
    %v607 = vunpack.c.h.b16 %v134
    %v608 = vunpack.c.h.b16 %v138
    %v609 = vpack.c.b16 %v606, %v605
    %v610 = vpack.c.b16 %v608, %v607
    %v614 = vsel %vm144, %v600, 0
    %616 = vmatprep.subr.bf16.mxu0 0
    %617 = vmatpush1.bf16.msra.mxu0 0
    %618 = vmatprep.subr.bf16.mxu0 0
    %619 = vmatpush1.bf16.msra.mxu0 0
    %620 = vmatprep.subr.bf16.mxu0 0
    %621 = vmatpush1.bf16.msra.mxu0 0
    %622 = vmatprep.subr.bf16.mxu0 0
    %623 = vmatpush1.bf16.msra.mxu0 0
    %624 = vmatprep.subr.bf16.mxu0 0
    %625 = vmatpush1.bf16.msra.mxu0 0
    %626 = vmatprep.subr.bf16.mxu0 0
    %627 = vmatpush1.bf16.msra.mxu0 0
    %628 = vmatprep.subr.bf16.mxu0 0
    %629 = vmatpush1.bf16.msra.mxu0 %v610
    %630 = vmatprep.subr.bf16.mxu0 0
    %631 = vmatpush1.bf16.msra.mxu0 %v609
    %632 = vmatprep.subr.bf16.mxu0 0
    %633 = vmatpush2.bf16.msra.mxu0 0
    %634 = vmatprep.subr.bf16.mxu0 0
    %635 = vmatpush2.bf16.msra.mxu0 0
    %636 = vmatprep.subr.bf16.mxu0 0
    %637 = vmatpush2.bf16.msra.mxu0 0
    %638 = vmatprep.subr.bf16.mxu0 0
    %639 = vmatpush2.bf16.msra.mxu0 0
    %640 = vmatprep.subr.bf16.mxu0 0
    %641 = vmatpush2.bf16.msra.mxu0 0
    %642 = vmatprep.subr.bf16.mxu0 0
    %643 = vmatpush2.bf16.msra.mxu0 0
    %644 = vmatprep.subr.bf16.mxu0 0
    %645 = vmatpush2.bf16.msra.mxu0 0
    %646 = vmatprep.subr.bf16.mxu0 0
    %647 = vmatpush2.bf16.msra.mxu0 0
    %648 = vmatprep.mubr.bf16.mxu0 0
    %649 = vmatmul.mubr.bf16.gmra.mxu0 %v614
    %v650 = vpop.f32.mrf.mxu0
    %v651 = vadd.f32 %v604, %v650
    %v652 = vpop.f32.mrf.mxu0
    %v653 = vpop.f32.mrf.mxu0
    %v654 = vadd.f32 %v604, %v653
    %v655 = vpop.f32.mrf.mxu0
    %656 = vdwg.mxu0
    %v657 = vadd.f32 %v90, %v651
    %v658 = vadd.f32 %v91, %v654
    %v659 = vsel %vm144, %v657, 0.0
    %660 = vadd.xlane.f32.xlu0 %v659
    %v661 = vpop.xlane.xlu0 %660
    %v662 = vsel %vm144, %v658, 0.0
    %663 = vadd.xlane.f32.xlu0 %v662
    %v664 = vpop.xlane.xlu0 %663
    %v665 = vmul.f32 %v661, %v151
    %v666 = vmul.f32 %v664, %v151
    %v667 = vsub.f32 %v657, %v665
    %v668 = vsub.f32 %v658, %v666
    %v669 = vmul.f32 %v667, %v667
    %v670 = vmul.f32 %v668, %v668
    %v671 = vsel %vm144, %v669, 0.0
    %672 = vadd.xlane.f32.xlu0 %v671
    %v673 = vpop.xlane.xlu0 %672
    %v674 = vsel %vm144, %v670, 0.0
    %675 = vadd.xlane.f32.xlu0 %v674
    %v676 = vpop.xlane.xlu0 %675
    %v677 = vmul.f32 %v673, 0.032258064
    %v678 = vmul.f32 %v676, 0.032258064
    %v679 = vrsqrt.pop %v677
    %v680 = vmul.f32 %v677, %v679
    %vm681 = vcmp.eq.f32.partialorder %v677, inf
    %v682 = vsel %vm681, %v677, %v680
    %vm683 = vcmp.eq.f32.partialorder %v677, 0.0
    %v684 = vand.u32 %v677, 2147483648
    %v685 = vsel %vm683, %v684, %v682
    %v686 = vrsqrt.pop %v678
    %v687 = vmul.f32 %v678, %v686
    %vm688 = vcmp.eq.f32.partialorder %v678, inf
    %v689 = vsel %vm688, %v678, %v687
    %vm690 = vcmp.eq.f32.partialorder %v678, 0.0
    %v691 = vand.u32 %v678, 2147483648
    %v692 = vsel %vm690, %v691, %v689
    %v693 = vadd.f32 %v685, 1e-06
    %v694 = vadd.f32 %v692, 1e-06
    %v695 = vrcp.pop %v693
    %v696 = vrcp.pop %v694
    %v697 = vlaneseq
    %v698 = vshrl.u32 %v697, 7
    %v699 = vsub.s32 1, %v698
    %v700 = vrot.slane %v143, %v699
    %v701 = vmul.f32 %v700, %v667
    %v702 = vmul.f32 %v700, %v668
    %v703 = vmul.f32 %v701, %v695
    %v704 = vmul.f32 %v702, %v696
    %v705 = vlaneseq
    %v706 = vshrl.u32 %v705, 7
    %v707 = vsub.s32 2, %v706
    %v708 = vrot.slane %v143, %v707
    %v709 = vadd.f32 %v703, %v708
    %v710 = vadd.f32 %v704, %v708
    %v711 = vsel %vm144, %v92, 0.0
    %712 = vadd.xlane.f32.xlu0 %v711
    %v713 = vpop.xlane.xlu0 %712
    %v714 = vsel %vm144, %v93, 0.0
    %715 = vadd.xlane.f32.xlu0 %v714
    %v716 = vpop.xlane.xlu0 %715
    %v717 = vmul.f32 %v713, %v151
    %v718 = vmul.f32 %v716, %v151
    %v719 = vsub.f32 %v92, %v717
    %v720 = vsub.f32 %v93, %v718
    %v721 = vmul.f32 %v719, %v719
    %v722 = vmul.f32 %v720, %v720
    %v723 = vsel %vm144, %v721, 0.0
    %724 = vadd.xlane.f32.xlu0 %v723
    %v725 = vpop.xlane.xlu0 %724
    %v726 = vsel %vm144, %v722, 0.0
    %727 = vadd.xlane.f32.xlu0 %v726
    %v728 = vpop.xlane.xlu0 %727
    %v729 = vmul.f32 %v725, 0.032258064
    %v730 = vmul.f32 %v728, 0.032258064
    %v731 = vrsqrt.pop %v729
    %v732 = vmul.f32 %v729, %v731
    %vm733 = vcmp.eq.f32.partialorder %v729, inf
    %v734 = vsel %vm733, %v729, %v732
    %vm735 = vcmp.eq.f32.partialorder %v729, 0.0
    %v736 = vand.u32 %v729, 2147483648
    %v737 = vsel %vm735, %v736, %v734
    %v738 = vrsqrt.pop %v730
    %v739 = vmul.f32 %v730, %v738
    %vm740 = vcmp.eq.f32.partialorder %v730, inf
    %v741 = vsel %vm740, %v730, %v739
    %vm742 = vcmp.eq.f32.partialorder %v730, 0.0
    %v743 = vand.u32 %v730, 2147483648
    %v744 = vsel %vm742, %v743, %v741
    %v745 = vadd.f32 %v737, 1e-06
    %v746 = vadd.f32 %v744, 1e-06
    %v747 = vrcp.pop %v745
    %v748 = vrcp.pop %v746
    %v749 = vmul.f32 %v700, %v719
    %v750 = vmul.f32 %v700, %v720
    %v751 = vmul.f32 %v749, %v747
    %v752 = vmul.f32 %v750, %v748
    %v753 = vadd.f32 %v751, %v708
    %v754 = vadd.f32 %v752, %v708
    %v755 = vpack.c.bf16 %v710, %v709
    %v756 = vlaneseq
    %v757 = vshrl.u32 %v756, 7
    %v758 = vsub.s32 2, %v757
    %v759 = vrot.slane %v142, %v758
    %v764 = vunpack.c.l.b16 %v127
    %v765 = vunpack.c.l.b16 %v131
    %v766 = vunpack.c.l.b16 %v135
    %v767 = vunpack.c.l.b16 %v139
    %v768 = vpack.c.b16 %v765, %v764
    %v769 = vpack.c.b16 %v767, %v766
    %v773 = vsel %vm144, %v755, 0
    %775 = vmatprep.subr.bf16.mxu0 0
    %776 = vmatpush1.bf16.msra.mxu0 0
    %777 = vmatprep.subr.bf16.mxu0 0
    %778 = vmatpush1.bf16.msra.mxu0 0
    %779 = vmatprep.subr.bf16.mxu0 0
    %780 = vmatpush1.bf16.msra.mxu0 0
    %781 = vmatprep.subr.bf16.mxu0 0
    %782 = vmatpush1.bf16.msra.mxu0 0
    %783 = vmatprep.subr.bf16.mxu0 0
    %784 = vmatpush1.bf16.msra.mxu0 0
    %785 = vmatprep.subr.bf16.mxu0 0
    %786 = vmatpush1.bf16.msra.mxu0 0
    %787 = vmatprep.subr.bf16.mxu0 0
    %788 = vmatpush1.bf16.msra.mxu0 %v769
    %789 = vmatprep.subr.bf16.mxu0 0
    %790 = vmatpush1.bf16.msra.mxu0 %v768
    %791 = vmatprep.subr.bf16.mxu0 0
    %792 = vmatpush2.bf16.msra.mxu0 0
    %793 = vmatprep.subr.bf16.mxu0 0
    %794 = vmatpush2.bf16.msra.mxu0 0
    %795 = vmatprep.subr.bf16.mxu0 0
    %796 = vmatpush2.bf16.msra.mxu0 0
    %797 = vmatprep.subr.bf16.mxu0 0
    %798 = vmatpush2.bf16.msra.mxu0 0
    %799 = vmatprep.subr.bf16.mxu0 0
    %800 = vmatpush2.bf16.msra.mxu0 0
    %801 = vmatprep.subr.bf16.mxu0 0
    %802 = vmatpush2.bf16.msra.mxu0 0
    %803 = vmatprep.subr.bf16.mxu0 0
    %804 = vmatpush2.bf16.msra.mxu0 0
    %805 = vmatprep.subr.bf16.mxu0 0
    %806 = vmatpush2.bf16.msra.mxu0 0
    %807 = vmatprep.mubr.bf16.mxu0 0
    %808 = vmatmul.mubr.bf16.gmra.mxu0 %v773
    %v809 = vpop.f32.mrf.mxu0
    %v810 = vadd.f32 %v759, %v809
    %v811 = vpop.f32.mrf.mxu0
    %v812 = vpop.f32.mrf.mxu0
    %v813 = vadd.f32 %v759, %v812
    %v814 = vpop.f32.mrf.mxu0
    %815 = vdwg.mxu0
    %v816 = vpack.c.bf16 %v754, %v753
    %v817 = vlaneseq
    %v818 = vshrl.u32 %v817, 7
    %v819 = vsub.s32 3, %v818
    %v820 = vrot.slane %v142, %v819
    %v821 = vunpack.c.h.b16 %v127
    %v822 = vunpack.c.h.b16 %v131
    %v823 = vunpack.c.h.b16 %v135
    %v824 = vunpack.c.h.b16 %v139
    %v825 = vpack.c.b16 %v822, %v821
    %v826 = vpack.c.b16 %v824, %v823
    %v830 = vsel %vm144, %v816, 0
    %832 = vmatprep.subr.bf16.mxu0 0
    %833 = vmatpush1.bf16.msra.mxu0 0
    %834 = vmatprep.subr.bf16.mxu0 0
    %835 = vmatpush1.bf16.msra.mxu0 0
    %836 = vmatprep.subr.bf16.mxu0 0
    %837 = vmatpush1.bf16.msra.mxu0 0
    %838 = vmatprep.subr.bf16.mxu0 0
    %839 = vmatpush1.bf16.msra.mxu0 0
    %840 = vmatprep.subr.bf16.mxu0 0
    %841 = vmatpush1.bf16.msra.mxu0 0
    %842 = vmatprep.subr.bf16.mxu0 0
    %843 = vmatpush1.bf16.msra.mxu0 0
    %844 = vmatprep.subr.bf16.mxu0 0
    %845 = vmatpush1.bf16.msra.mxu0 %v826
    %846 = vmatprep.subr.bf16.mxu0 0
    %847 = vmatpush1.bf16.msra.mxu0 %v825
    %848 = vmatprep.subr.bf16.mxu0 0
    %849 = vmatpush2.bf16.msra.mxu0 0
    %850 = vmatprep.subr.bf16.mxu0 0
    %851 = vmatpush2.bf16.msra.mxu0 0
    %852 = vmatprep.subr.bf16.mxu0 0
    %853 = vmatpush2.bf16.msra.mxu0 0
    %854 = vmatprep.subr.bf16.mxu0 0
    %855 = vmatpush2.bf16.msra.mxu0 0
    %856 = vmatprep.subr.bf16.mxu0 0
    %857 = vmatpush2.bf16.msra.mxu0 0
    %858 = vmatprep.subr.bf16.mxu0 0
    %859 = vmatpush2.bf16.msra.mxu0 0
    %860 = vmatprep.subr.bf16.mxu0 0
    %861 = vmatpush2.bf16.msra.mxu0 0
    %862 = vmatprep.subr.bf16.mxu0 0
    %863 = vmatpush2.bf16.msra.mxu0 0
    %864 = vmatprep.mubr.bf16.mxu0 0
    %865 = vmatmul.mubr.bf16.gmra.mxu0 %v830
    %v866 = vpop.f32.mrf.mxu0
    %v867 = vadd.f32 %v820, %v866
    %v868 = vpop.f32.mrf.mxu0
    %v869 = vpop.f32.mrf.mxu0
    %v870 = vadd.f32 %v820, %v869
    %v871 = vpop.f32.mrf.mxu0
    %872 = vmatprep.mubr.bf16.mxu0 0
    %873 = vmatmul.mubr.bf16.gmra.mxu0 %v830
    %v874 = vpop.f32.mrf.mxu0
    %v875 = vadd.f32 %v820, %v874
    %v876 = vpop.f32.mrf.mxu0
    %v877 = vpop.f32.mrf.mxu0
    %v878 = vadd.f32 %v820, %v877
    %v879 = vpop.f32.mrf.mxu0
    %880 = vmatprep.mubr.bf16.mxu0 0
    %881 = vmatmul.mubr.bf16.gmra.mxu0 %v830
    %v882 = vpop.f32.mrf.mxu0
    %v883 = vadd.f32 %v820, %v882
    %v884 = vpop.f32.mrf.mxu0
    %v885 = vpop.f32.mrf.mxu0
    %v886 = vadd.f32 %v820, %v885
    %v887 = vpop.f32.mrf.mxu0
    %888 = vmatprep.mubr.bf16.mxu0 0
    %889 = vmatmul.mubr.bf16.gmra.mxu0 %v830
    %v890 = vpop.f32.mrf.mxu0
    %v891 = vadd.f32 %v820, %v890
    %v892 = vpop.f32.mrf.mxu0
    %v893 = vpop.f32.mrf.mxu0
    %v894 = vadd.f32 %v820, %v893
    %v895 = vpop.f32.mrf.mxu0
    %896 = vdwg.mxu0
    %v897 = vmul.f32 %v867, %v95
    %v898 = vmul.f32 %v870, %v99
    %v899 = vmul.f32 %v875, %v103
    %v900 = vmul.f32 %v878, %v107
    %v901 = vmul.f32 %v883, %v111
    %v902 = vmul.f32 %v886, %v115
    %v903 = vmul.f32 %v891, %v119
    %v904 = vmul.f32 %v894, %v123
    %v905 = vpack.c.bf16 %v813, %v810
    %v906 = vpack.c.bf16 %v898, %v897
    %v907 = vpack.c.bf16 %v900, %v899
    %v908 = vpack.c.bf16 %v902, %v901
    %v909 = vpack.c.bf16 %v904, %v903
    %v911 = vsel %vm144, %v905, 0
    %v914 = vsel %vm144, %v906, 0
    %v917 = vsel %vm144, %v907, 0
    %v920 = vsel %vm144, %v908, 0
    %v923 = vsel %vm144, %v909, 0
    %925 = vmatprep.subr.bf16.mxu0 0
    %926 = vmatpush1.bf16.xpose.msra.mxu0 0
    %927 = vmatprep.subr.bf16.mxu0 0
    %928 = vmatpush1.bf16.xpose.msra.mxu0 0
    %929 = vmatprep.subr.bf16.mxu0 0
    %930 = vmatpush1.bf16.xpose.msra.mxu0 0
    %931 = vmatprep.subr.bf16.mxu0 0
    %932 = vmatpush1.bf16.xpose.msra.mxu0 0
    %933 = vmatprep.subr.bf16.mxu0 0
    %934 = vmatpush1.bf16.xpose.msra.mxu0 %v923
    %935 = vmatprep.subr.bf16.mxu0 0
    %936 = vmatpush1.bf16.xpose.msra.mxu0 %v920
    %937 = vmatprep.subr.bf16.mxu0 0
    %938 = vmatpush1.bf16.xpose.msra.mxu0 %v917
    %939 = vmatprep.subr.bf16.mxu0 0
    %940 = vmatpush1.bf16.xpose.msra.mxu0 %v914
    %941 = vmatprep.subr.bf16.mxu0 0
    %942 = vmatpush2.bf16.xpose.msra.mxu0 0
    %943 = vmatprep.subr.bf16.mxu0 0
    %944 = vmatpush2.bf16.xpose.msra.mxu0 0
    %945 = vmatprep.subr.bf16.mxu0 0
    %946 = vmatpush2.bf16.xpose.msra.mxu0 0
    %947 = vmatprep.subr.bf16.mxu0 0
    %948 = vmatpush2.bf16.xpose.msra.mxu0 0
    %949 = vmatprep.subr.bf16.mxu0 0
    %950 = vmatpush2.bf16.xpose.msra.mxu0 0
    %951 = vmatprep.subr.bf16.mxu0 0
    %952 = vmatpush2.bf16.xpose.msra.mxu0 0
    %953 = vmatprep.subr.bf16.mxu0 0
    %954 = vmatpush2.bf16.xpose.msra.mxu0 0
    %955 = vmatprep.subr.bf16.mxu0 0
    %956 = vmatpush2.bf16.xpose.msra.mxu0 0
    %957 = vmatprep.mubr.bf16.mxu0 0
    %958 = vmatmul.mubr.bf16.gmra.mxu0 %v911
    %v959 = vpop.f32.mrf.mxu0
    %v960 = vadd.f32 0.0, %v959
    %v961 = vpop.f32.mrf.mxu0
    %v962 = vpop.f32.mrf.mxu0
    %v963 = vadd.f32 0.0, %v962
    %v964 = vpop.f32.mrf.mxu0
    %965 = vmatprep.mubr.bf16.mxu0 0
    %966 = vmatmul.mubr.bf16.gmra.mxu0 %v911
    %v967 = vpop.f32.mrf.mxu0
    %v968 = vadd.f32 0.0, %v967
    %v969 = vpop.f32.mrf.mxu0
    %v970 = vpop.f32.mrf.mxu0
    %v971 = vadd.f32 0.0, %v970
    %v972 = vpop.f32.mrf.mxu0
    %973 = vmatprep.mubr.bf16.mxu0 0
    %974 = vmatmul.mubr.bf16.gmra.mxu0 %v911
    %v975 = vpop.f32.mrf.mxu0
    %v976 = vadd.f32 0.0, %v975
    %v977 = vpop.f32.mrf.mxu0
    %v978 = vpop.f32.mrf.mxu0
    %v979 = vadd.f32 0.0, %v978
    %v980 = vpop.f32.mrf.mxu0
    %981 = vmatprep.mubr.bf16.mxu0 0
    %982 = vmatmul.mubr.bf16.gmra.mxu0 %v911
    %v983 = vpop.f32.mrf.mxu0
    %v984 = vadd.f32 0.0, %v983
    %v985 = vpop.f32.mrf.mxu0
    %v986 = vpop.f32.mrf.mxu0
    %v987 = vadd.f32 0.0, %v986
    %v988 = vpop.f32.mrf.mxu0
    %989 = vdwg.mxu0
    %v990 = vmul.f32 %v960, 0.35355338
    %v991 = vmul.f32 %v963, 0.35355338
    %v992 = vmul.f32 %v968, 0.35355338
    %v993 = vmul.f32 %v971, 0.35355338
    %v994 = vmul.f32 %v976, 0.35355338
    %v995 = vmul.f32 %v979, 0.35355338
    %v996 = vmul.f32 %v984, 0.35355338
    %v997 = vmul.f32 %v987, 0.35355338
    %v998 = vadd.f32 %v990, %v97
    %v999 = vadd.f32 %v991, %v101
    %v1000 = vadd.f32 %v992, %v105
    %v1001 = vadd.f32 %v993, %v109
    %v1002 = vadd.f32 %v994, %v113
    %v1003 = vadd.f32 %v995, %v117
    %v1004 = vadd.f32 %v996, %v121
    %v1005 = vadd.f32 %v997, %v125
    %v1006 = vsel %vm412, %v998, -inf
    %1007 = vmax.xlane.f32.xlu0 %v1006
    %v1008 = vpop.xlane.xlu0 %1007
    %v1009 = vsel %vm412, %v999, -inf
    %1010 = vmax.xlane.f32.xlu0 %v1009
    %v1011 = vpop.xlane.xlu0 %1010
    %v1012 = vsel %vm412, %v1000, -inf
    %1013 = vmax.xlane.f32.xlu0 %v1012
    %v1014 = vpop.xlane.xlu0 %1013
    %v1015 = vsel %vm412, %v1001, -inf
    %1016 = vmax.xlane.f32.xlu0 %v1015
    %v1017 = vpop.xlane.xlu0 %1016
    %v1018 = vsel %vm412, %v1002, -inf
    %1019 = vmax.xlane.f32.xlu0 %v1018
    %v1020 = vpop.xlane.xlu0 %1019
    %v1021 = vsel %vm412, %v1003, -inf
    %1022 = vmax.xlane.f32.xlu0 %v1021
    %v1023 = vpop.xlane.xlu0 %1022
    %v1024 = vsel %vm412, %v1004, -inf
    %1025 = vmax.xlane.f32.xlu0 %v1024
    %v1026 = vpop.xlane.xlu0 %1025
    %v1027 = vsel %vm412, %v1005, -inf
    %1028 = vmax.xlane.f32.xlu0 %v1027
    %v1029 = vpop.xlane.xlu0 %1028
    %v1030 = vsub.f32 %v998, %v1008
    %v1031 = vsub.f32 %v999, %v1011
    %v1032 = vsub.f32 %v1000, %v1014
    %v1033 = vsub.f32 %v1001, %v1017
    %v1034 = vsub.f32 %v1002, %v1020
    %v1035 = vsub.f32 %v1003, %v1023
    %v1036 = vsub.f32 %v1004, %v1026
    %v1037 = vsub.f32 %v1005, %v1029
    %v1038 = vmul.f32 %v1030, 1.442695
    %v1039 = vpow.pop %v1038
    %v1040 = vmul.f32 %v1031, 1.442695
    %v1041 = vpow.pop %v1040
    %v1042 = vmul.f32 %v1032, 1.442695
    %v1043 = vpow.pop %v1042
    %v1044 = vmul.f32 %v1033, 1.442695
    %v1045 = vpow.pop %v1044
    %v1046 = vmul.f32 %v1034, 1.442695
    %v1047 = vpow.pop %v1046
    %v1048 = vmul.f32 %v1035, 1.442695
    %v1049 = vpow.pop %v1048
    %v1050 = vmul.f32 %v1036, 1.442695
    %v1051 = vpow.pop %v1050
    %v1052 = vmul.f32 %v1037, 1.442695
    %v1053 = vpow.pop %v1052
    %v1054 = vsel %vm412, %v1039, 0.0
    %1055 = vadd.xlane.f32.xlu0 %v1054
    %v1056 = vpop.xlane.xlu0 %1055
    %v1057 = vsel %vm412, %v1041, 0.0
    %1058 = vadd.xlane.f32.xlu0 %v1057
    %v1059 = vpop.xlane.xlu0 %1058
    %v1060 = vsel %vm412, %v1043, 0.0
    %1061 = vadd.xlane.f32.xlu0 %v1060
    %v1062 = vpop.xlane.xlu0 %1061
    %v1063 = vsel %vm412, %v1045, 0.0
    %1064 = vadd.xlane.f32.xlu0 %v1063
    %v1065 = vpop.xlane.xlu0 %1064
    %v1066 = vsel %vm412, %v1047, 0.0
    %1067 = vadd.xlane.f32.xlu0 %v1066
    %v1068 = vpop.xlane.xlu0 %1067
    %v1069 = vsel %vm412, %v1049, 0.0
    %1070 = vadd.xlane.f32.xlu0 %v1069
    %v1071 = vpop.xlane.xlu0 %1070
    %v1072 = vsel %vm412, %v1051, 0.0
    %1073 = vadd.xlane.f32.xlu0 %v1072
    %v1074 = vpop.xlane.xlu0 %1073
    %v1075 = vsel %vm412, %v1053, 0.0
    %1076 = vadd.xlane.f32.xlu0 %v1075
    %v1077 = vpop.xlane.xlu0 %1076
    %v1078 = vrcp.pop %v1056
    %v1079 = vrcp.pop %v1059
    %v1080 = vrcp.pop %v1062
    %v1081 = vrcp.pop %v1065
    %v1082 = vrcp.pop %v1068
    %v1083 = vrcp.pop %v1071
    %v1084 = vrcp.pop %v1074
    %v1085 = vrcp.pop %v1077
    %v1086 = vmul.f32 %v1039, %v1078
    %v1087 = vmul.f32 %v1041, %v1079
    %v1088 = vmul.f32 %v1043, %v1080
    %v1089 = vmul.f32 %v1045, %v1081
    %v1090 = vmul.f32 %v1047, %v1082
    %v1091 = vmul.f32 %v1049, %v1083
    %v1092 = vmul.f32 %v1051, %v1084
    %v1093 = vmul.f32 %v1053, %v1085
    %v1094 = vpack.c.bf16 %v1087, %v1086
    %v1095 = vpack.c.bf16 %v1089, %v1088
    %v1096 = vpack.c.bf16 %v1091, %v1090
    %v1097 = vpack.c.bf16 %v1093, %v1092
    %1102 = vrot.lane.b32.xlu0 %v906, 96
    %v1103 = vpop.permute.xlu0 %1102
    %1104 = vrot.lane.b32.xlu0 %v907, 96
    %v1105 = vpop.permute.xlu0 %1104
    %1106 = vrot.lane.b32.xlu0 %v908, 96
    %v1107 = vpop.permute.xlu0 %1106
    %1108 = vrot.lane.b32.xlu0 %v909, 96
    %v1109 = vpop.permute.xlu0 %1108
    %v1115 = vsel %vm412, %v1094, 0
    %v1118 = vsel %vm412, %v1095, 0
    %v1121 = vsel %vm412, %v1096, 0
    %v1124 = vsel %vm412, %v1097, 0
    %1126 = vmatprep.subr.bf16.mxu0 0
    %1127 = vmatpush1.bf16.msra.mxu0 0
    %1128 = vmatprep.subr.bf16.mxu0 0
    %1129 = vmatpush1.bf16.msra.mxu0 0
    %1130 = vmatprep.subr.bf16.mxu0 0
    %1131 = vmatpush1.bf16.msra.mxu0 0
    %1132 = vmatprep.subr.bf16.mxu0 0
    %1133 = vmatpush1.bf16.msra.mxu0 0
    %1134 = vmatprep.subr.bf16.mxu0 0
    %1135 = vmatpush1.bf16.msra.mxu0 %v1109
    %1136 = vmatprep.subr.bf16.mxu0 0
    %1137 = vmatpush1.bf16.msra.mxu0 %v1107
    %1138 = vmatprep.subr.bf16.mxu0 0
    %1139 = vmatpush1.bf16.msra.mxu0 %v1105
    %1140 = vmatprep.subr.bf16.mxu0 0
    %1141 = vmatpush1.bf16.msra.mxu0 %v1103
    %1142 = vmatprep.subr.bf16.mxu0 0
    %1143 = vmatpush2.bf16.msra.mxu0 0
    %1144 = vmatprep.subr.bf16.mxu0 0
    %1145 = vmatpush2.bf16.msra.mxu0 0
    %1146 = vmatprep.subr.bf16.mxu0 0
    %1147 = vmatpush2.bf16.msra.mxu0 0
    %1148 = vmatprep.subr.bf16.mxu0 0
    %1149 = vmatpush2.bf16.msra.mxu0 0
    %1150 = vmatprep.subr.bf16.mxu0 0
    %1151 = vmatpush2.bf16.msra.mxu0 0
    %1152 = vmatprep.subr.bf16.mxu0 0
    %1153 = vmatpush2.bf16.msra.mxu0 0
    %1154 = vmatprep.subr.bf16.mxu0 0
    %1155 = vmatpush2.bf16.msra.mxu0 0
    %1156 = vmatprep.subr.bf16.mxu0 0
    %1157 = vmatpush2.bf16.msra.mxu0 0
    %1158 = vmatprep.mubr.bf16.mxu0 0
    %1159 = vmatmul.mubr.bf16.gmra.mxu0 %v1115
    %v1160 = vpop.f32.mrf.mxu0
    %v1161 = vadd.f32 0.0, %v1160
    %v1162 = vpop.f32.mrf.mxu0
    %v1163 = vpop.f32.mrf.mxu0
    %v1164 = vadd.f32 0.0, %v1163
    %v1165 = vpop.f32.mrf.mxu0
    %1166 = vmatprep.mubr.bf16.mxu0 0
    %1167 = vmatmul.mubr.bf16.gmra.mxu0 %v1118
    %v1168 = vpop.f32.mrf.mxu0
    %v1169 = vadd.f32 0.0, %v1168
    %v1170 = vpop.f32.mrf.mxu0
    %v1171 = vpop.f32.mrf.mxu0
    %v1172 = vadd.f32 0.0, %v1171
    %v1173 = vpop.f32.mrf.mxu0
    %1174 = vmatprep.mubr.bf16.mxu0 0
    %1175 = vmatmul.mubr.bf16.gmra.mxu0 %v1121
    %v1176 = vpop.f32.mrf.mxu0
    %v1177 = vadd.f32 0.0, %v1176
    %v1178 = vpop.f32.mrf.mxu0
    %v1179 = vpop.f32.mrf.mxu0
    %v1180 = vadd.f32 0.0, %v1179
    %v1181 = vpop.f32.mrf.mxu0
    %1182 = vmatprep.mubr.bf16.mxu0 0
    %1183 = vmatmul.mubr.bf16.gmra.mxu0 %v1124
    %v1184 = vpop.f32.mrf.mxu0
    %v1185 = vadd.f32 0.0, %v1184
    %v1186 = vpop.f32.mrf.mxu0
    %v1187 = vpop.f32.mrf.mxu0
    %v1188 = vadd.f32 0.0, %v1187
    %v1189 = vpop.f32.mrf.mxu0
    %1190 = vdwg.mxu0
    %v1191 = vadd.f32 %v1161, %v1169
    %v1192 = vadd.f32 %v1164, %v1172
    %v1193 = vadd.f32 %v1191, %v1177
    %v1194 = vadd.f32 %v1192, %v1180
    %v1195 = vadd.f32 %v1193, %v1185
    %v1196 = vadd.f32 %v1194, %v1188
    %v1197 = vpack.c.bf16 %v1196, %v1195
    %v1198 = vlaneseq
    %v1199 = vshrl.u32 %v1198, 7
    %v1200 = vsub.s32 4, %v1199
    %v1201 = vrot.slane %v142, %v1200
    %v1206 = vunpack.c.l.b16 %v128
    %v1207 = vunpack.c.l.b16 %v132
    %v1208 = vunpack.c.l.b16 %v136
    %v1209 = vunpack.c.l.b16 %v140
    %v1210 = vpack.c.b16 %v1207, %v1206
    %v1211 = vpack.c.b16 %v1209, %v1208
    %v1215 = vsel %vm144, %v1197, 0
    %1217 = vmatprep.subr.bf16.mxu0 0
    %1218 = vmatpush1.bf16.msra.mxu0 0
    %1219 = vmatprep.subr.bf16.mxu0 0
    %1220 = vmatpush1.bf16.msra.mxu0 0
    %1221 = vmatprep.subr.bf16.mxu0 0
    %1222 = vmatpush1.bf16.msra.mxu0 0
    %1223 = vmatprep.subr.bf16.mxu0 0
    %1224 = vmatpush1.bf16.msra.mxu0 0
    %1225 = vmatprep.subr.bf16.mxu0 0
    %1226 = vmatpush1.bf16.msra.mxu0 0
    %1227 = vmatprep.subr.bf16.mxu0 0
    %1228 = vmatpush1.bf16.msra.mxu0 0
    %1229 = vmatprep.subr.bf16.mxu0 0
    %1230 = vmatpush1.bf16.msra.mxu0 %v1211
    %1231 = vmatprep.subr.bf16.mxu0 0
    %1232 = vmatpush1.bf16.msra.mxu0 %v1210
    %1233 = vmatprep.subr.bf16.mxu0 0
    %1234 = vmatpush2.bf16.msra.mxu0 0
    %1235 = vmatprep.subr.bf16.mxu0 0
    %1236 = vmatpush2.bf16.msra.mxu0 0
    %1237 = vmatprep.subr.bf16.mxu0 0
    %1238 = vmatpush2.bf16.msra.mxu0 0
    %1239 = vmatprep.subr.bf16.mxu0 0
    %1240 = vmatpush2.bf16.msra.mxu0 0
    %1241 = vmatprep.subr.bf16.mxu0 0
    %1242 = vmatpush2.bf16.msra.mxu0 0
    %1243 = vmatprep.subr.bf16.mxu0 0
    %1244 = vmatpush2.bf16.msra.mxu0 0
    %1245 = vmatprep.subr.bf16.mxu0 0
    %1246 = vmatpush2.bf16.msra.mxu0 0
    %1247 = vmatprep.subr.bf16.mxu0 0
    %1248 = vmatpush2.bf16.msra.mxu0 0
    %1249 = vmatprep.mubr.bf16.mxu0 0
    %1250 = vmatmul.mubr.bf16.gmra.mxu0 %v1215
    %v1251 = vpop.f32.mrf.mxu0
    %v1252 = vadd.f32 %v1201, %v1251
    %v1253 = vpop.f32.mrf.mxu0
    %v1254 = vpop.f32.mrf.mxu0
    %v1255 = vadd.f32 %v1201, %v1254
    %v1256 = vpop.f32.mrf.mxu0
    %1257 = vdwg.mxu0
    %v1258 = vadd.f32 %v657, %v1252
    %v1259 = vadd.f32 %v658, %v1255
    %v1260 = vsel %vm144, %v1258, 0.0
    %1261 = vadd.xlane.f32.xlu0 %v1260
    %v1262 = vpop.xlane.xlu0 %1261
    %v1263 = vsel %vm144, %v1259, 0.0
    %1264 = vadd.xlane.f32.xlu0 %v1263
    %v1265 = vpop.xlane.xlu0 %1264
    %v1266 = vmul.f32 %v1262, %v151
    %v1267 = vmul.f32 %v1265, %v151
    %v1268 = vsub.f32 %v1258, %v1266
    %v1269 = vsub.f32 %v1259, %v1267
    %v1270 = vmul.f32 %v1268, %v1268
    %v1271 = vmul.f32 %v1269, %v1269
    %v1272 = vsel %vm144, %v1270, 0.0
    %1273 = vadd.xlane.f32.xlu0 %v1272
    %v1274 = vpop.xlane.xlu0 %1273
    %v1275 = vsel %vm144, %v1271, 0.0
    %1276 = vadd.xlane.f32.xlu0 %v1275
    %v1277 = vpop.xlane.xlu0 %1276
    %v1278 = vmul.f32 %v1274, 0.032258064
    %v1279 = vmul.f32 %v1277, 0.032258064
    %v1280 = vrsqrt.pop %v1278
    %v1281 = vmul.f32 %v1278, %v1280
    %vm1282 = vcmp.eq.f32.partialorder %v1278, inf
    %v1283 = vsel %vm1282, %v1278, %v1281
    %vm1284 = vcmp.eq.f32.partialorder %v1278, 0.0
    %v1285 = vand.u32 %v1278, 2147483648
    %v1286 = vsel %vm1284, %v1285, %v1283
    %v1287 = vrsqrt.pop %v1279
    %v1288 = vmul.f32 %v1279, %v1287
    %vm1289 = vcmp.eq.f32.partialorder %v1279, inf
    %v1290 = vsel %vm1289, %v1279, %v1288
    %vm1291 = vcmp.eq.f32.partialorder %v1279, 0.0
    %v1292 = vand.u32 %v1279, 2147483648
    %v1293 = vsel %vm1291, %v1292, %v1290
    %v1294 = vadd.f32 %v1286, 1e-06
    %v1295 = vadd.f32 %v1293, 1e-06
    %v1296 = vrcp.pop %v1294
    %v1297 = vrcp.pop %v1295
    %v1298 = vlaneseq
    %v1299 = vshrl.u32 %v1298, 7
    %v1300 = vsub.s32 3, %v1299
    %v1301 = vrot.slane %v143, %v1300
    %v1302 = vmul.f32 %v1301, %v1268
    %v1303 = vmul.f32 %v1301, %v1269
    %v1304 = vmul.f32 %v1302, %v1296
    %v1305 = vmul.f32 %v1303, %v1297
    %v1306 = vlaneseq
    %v1307 = vshrl.u32 %v1306, 7
    %v1308 = vsub.s32 4, %v1307
    %v1309 = vrot.slane %v143, %v1308
    %v1310 = vadd.f32 %v1304, %v1309
    %v1311 = vadd.f32 %v1305, %v1309
    %v1312 = vpack.c.bf16 %v1311, %v1310
    %v1313 = vlaneseq
    %v1314 = vshrl.u32 %v1313, 7
    %v1315 = vsub.s32 5, %v1314
    %v1316 = vrot.slane %v142, %v1315
    %v1317 = vunpack.c.h.b16 %v128
    %v1318 = vunpack.c.h.b16 %v132
    %v1319 = vunpack.c.h.b16 %v136
    %v1320 = vunpack.c.h.b16 %v140
    %v1321 = vpack.c.b16 %v1318, %v1317
    %v1322 = vpack.c.b16 %v1320, %v1319
    %v1326 = vsel %vm144, %v1312, 0
    %1328 = vmatprep.subr.bf16.mxu0 0
    %1329 = vmatpush1.bf16.msra.mxu0 0
    %1330 = vmatprep.subr.bf16.mxu0 0
    %1331 = vmatpush1.bf16.msra.mxu0 0
    %1332 = vmatprep.subr.bf16.mxu0 0
    %1333 = vmatpush1.bf16.msra.mxu0 0
    %1334 = vmatprep.subr.bf16.mxu0 0
    %1335 = vmatpush1.bf16.msra.mxu0 0
    %1336 = vmatprep.subr.bf16.mxu0 0
    %1337 = vmatpush1.bf16.msra.mxu0 0
    %1338 = vmatprep.subr.bf16.mxu0 0
    %1339 = vmatpush1.bf16.msra.mxu0 0
    %1340 = vmatprep.subr.bf16.mxu0 0
    %1341 = vmatpush1.bf16.msra.mxu0 %v1322
    %1342 = vmatprep.subr.bf16.mxu0 0
    %1343 = vmatpush1.bf16.msra.mxu0 %v1321
    %1344 = vmatprep.subr.bf16.mxu0 0
    %1345 = vmatpush2.bf16.msra.mxu0 0
    %1346 = vmatprep.subr.bf16.mxu0 0
    %1347 = vmatpush2.bf16.msra.mxu0 0
    %1348 = vmatprep.subr.bf16.mxu0 0
    %1349 = vmatpush2.bf16.msra.mxu0 0
    %1350 = vmatprep.subr.bf16.mxu0 0
    %1351 = vmatpush2.bf16.msra.mxu0 0
    %1352 = vmatprep.subr.bf16.mxu0 0
    %1353 = vmatpush2.bf16.msra.mxu0 0
    %1354 = vmatprep.subr.bf16.mxu0 0
    %1355 = vmatpush2.bf16.msra.mxu0 0
    %1356 = vmatprep.subr.bf16.mxu0 0
    %1357 = vmatpush2.bf16.msra.mxu0 0
    %1358 = vmatprep.subr.bf16.mxu0 0
    %1359 = vmatpush2.bf16.msra.mxu0 0
    %1360 = vmatprep.mubr.bf16.mxu0 0
    %1361 = vmatmul.mubr.bf16.gmra.mxu0 %v1326
    %v1362 = vpop.f32.mrf.mxu0
    %v1363 = vadd.f32 %v1316, %v1362
    %v1364 = vpop.f32.mrf.mxu0
    %v1365 = vpop.f32.mrf.mxu0
    %v1366 = vadd.f32 %v1316, %v1365
    %v1367 = vpop.f32.mrf.mxu0
    %1368 = vdwg.mxu0
    %v1369 = vmax.f32 %v1363, 0.0
    %v1370 = vmax.f32 %v1366, 0.0
    %v1371 = vpack.c.bf16 %v1370, %v1369
    %v1372 = vlaneseq
    %v1373 = vshrl.u32 %v1372, 7
    %v1374 = vsub.s32 6, %v1373
    %v1375 = vrot.slane %v142, %v1374
    %v1380 = vunpack.c.l.b16 %v129
    %v1381 = vunpack.c.l.b16 %v133
    %v1382 = vunpack.c.l.b16 %v137
    %v1383 = vunpack.c.l.b16 %v141
    %v1384 = vpack.c.b16 %v1381, %v1380
    %v1385 = vpack.c.b16 %v1383, %v1382
    %v1387 = vsel %vm412, %v1371, 0
    %v1390 = vsel %vm412, %v1384, 0
    %v1393 = vsel %vm412, %v1385, 0
    %1395 = vmatprep.subr.bf16.mxu0 0
    %1396 = vmatpush1.bf16.xpose.msra.mxu0 0
    %1397 = vmatprep.subr.bf16.mxu0 0
    %1398 = vmatpush1.bf16.xpose.msra.mxu0 0
    %1399 = vmatprep.subr.bf16.mxu0 0
    %1400 = vmatpush1.bf16.xpose.msra.mxu0 0
    %1401 = vmatprep.subr.bf16.mxu0 0
    %1402 = vmatpush1.bf16.xpose.msra.mxu0 0
    %1403 = vmatprep.subr.bf16.mxu0 0
    %1404 = vmatpush1.bf16.xpose.msra.mxu0 0
    %1405 = vmatprep.subr.bf16.mxu0 0
    %1406 = vmatpush1.bf16.xpose.msra.mxu0 0
    %1407 = vmatprep.subr.bf16.mxu0 0
    %1408 = vmatpush1.bf16.xpose.msra.mxu0 %v1393
    %1409 = vmatprep.subr.bf16.mxu0 0
    %1410 = vmatpush1.bf16.xpose.msra.mxu0 %v1390
    %1411 = vmatprep.subr.bf16.mxu0 0
    %1412 = vmatpush2.bf16.xpose.msra.mxu0 0
    %1413 = vmatprep.subr.bf16.mxu0 0
    %1414 = vmatpush2.bf16.xpose.msra.mxu0 0
    %1415 = vmatprep.subr.bf16.mxu0 0
    %1416 = vmatpush2.bf16.xpose.msra.mxu0 0
    %1417 = vmatprep.subr.bf16.mxu0 0
    %1418 = vmatpush2.bf16.xpose.msra.mxu0 0
    %1419 = vmatprep.subr.bf16.mxu0 0
    %1420 = vmatpush2.bf16.xpose.msra.mxu0 0
    %1421 = vmatprep.subr.bf16.mxu0 0
    %1422 = vmatpush2.bf16.xpose.msra.mxu0 0
    %1423 = vmatprep.subr.bf16.mxu0 0
    %1424 = vmatpush2.bf16.xpose.msra.mxu0 0
    %1425 = vmatprep.subr.bf16.mxu0 0
    %1426 = vmatpush2.bf16.xpose.msra.mxu0 0
    %1427 = vmatprep.mubr.bf16.mxu0 0
    %1428 = vmatmul.mubr.bf16.gmra.mxu0 %v1387
    %v1429 = vpop.f32.mrf.mxu0
    %v1430 = vadd.f32 %v1375, %v1429
    %v1431 = vpop.f32.mrf.mxu0
    %v1432 = vpop.f32.mrf.mxu0
    %v1433 = vadd.f32 %v1375, %v1432
    %v1434 = vpop.f32.mrf.mxu0
    %1435 = vdwg.mxu0
    %v1436 = vadd.f32 %v1258, %v1430
    %v1437 = vadd.f32 %v1259, %v1433
    %1438 = vst.msk [vmem:[#allocation11] sm:$0xff] %vm144, %v1436
    %1439 = vst.msk [vmem:[#allocation11 + $0x8] sm:$0xff] %vm144, %v1437
    // Predicated region
    $region42: #{tpu_custom_call.1} parent=1 // pred_check
      _
    $region43: #{tpu_custom_call.1} parent=1 // pred_check_branch
      %1441 = sbr.rel (0) target = $region45
    $region44: #{tpu_custom_call.1} parent=1 // pred_region
      %s1443 = ssub.s32 256, 256
      %1444 = vsyncadd [#allocation4], %s1443
      %s1445 = sshll.u32 [#allocation11], 4
      %s1446 = int_to_ptr.vmem [resolvable:$true] %s1445
      %1451 = dma.vmem_to_hbm [thread:$0]  %s1446, 256, %s5, [#allocation4], 128, 128, 8
    $region45: #{tpu_custom_call.1} parent=1 // pred_fallthru
      _
    // Predicated region
    $region46: #{tpu_custom_call.1} parent=1 // pred_check
      _
    $region47: #{tpu_custom_call.1} parent=1 // pred_check_branch
      %1453 = sbr.rel (0) target = $region49
    $region48: #{tpu_custom_call.1} parent=1 // pred_region
      %1454 = dma.done [#allocation4], 256
    $region49: #{tpu_custom_call.1} parent=1 // pred_fallthru
      _
    %1455 = vsyncpa [#allocation3], 1
    %1456 = vsyncpa [#allocation6], 1
    %1457 = vsyncpa [#allocation9], 1
    %1458 = vsyncpa [#allocation4], 1

</llo_original>
